<compile_context>
chip_gen: v7x
topology: tpu7x:2x2x1
jax: 0.10.0
libtpu: 0.0.40
codegen_flags: <defaults>
</compile_context>

<pallas_src>
import jax
import jax.numpy as jnp
from jax.experimental import pallas as pl
from jax.experimental.pallas import tpu as pltpu


# --------------------------------------------------------------------------- #
# Pallas kernel: one heat-kernel graph-convolution layer (fused epilogue)
# --------------------------------------------------------------------------- #
def _make_heat_layer_kernel(num_poly: int, hk_threshold: float,
                            mask_scale: float, apply_log_softmax: bool):
    def kernel(coeff_ref, pn_ref, x_ref, out_ref, mask_ref, acc_ref):
        k = pl.program_id(1)

        @pl.when(k == 0)
        def _init():
            acc_ref[...] = jnp.zeros_like(acc_ref)

        # ---- build the heat-kernel tile on the VPU (f32) ----
        coeff = coeff_ref[...]                      # (tm, M+1) f32
        hk = coeff[:, 0:1] * pn_ref[0]              # (tm, tk)
        for n in range(1, num_poly):                # static unroll, M+1 small
            hk = hk + coeff[:, n:n + 1] * pn_ref[n]
        # sparsification threshold (f32, before any downcast)
        hk = jnp.where(hk < hk_threshold, 0.0, hk)

        # ---- MXU matmul: bf16 inputs, f32 accumulation in VMEM scratch ----
        acc_ref[...] += jnp.dot(hk.astype(jnp.bfloat16),
                                x_ref[...].astype(jnp.bfloat16),
                                preferred_element_type=jnp.float32)

        # ---- epilogue on last contraction step ----
        @pl.when(k == pl.num_programs(1) - 1)
        def _finalize():
            pre = acc_ref[...]                                  # f32
            relu_mask = (pre > 0.0).astype(jnp.float32)
            act = pre * relu_mask                               # relu via mask reuse
            mask_ref[...] = (relu_mask * mask_scale).astype(mask_ref.dtype)
            if apply_log_softmax:
                z = act - jnp.max(act, axis=-1, keepdims=True)
                lse = jnp.log(jnp.sum(jnp.exp(z), axis=-1, keepdims=True))
                out_ref[...] = (z - lse).astype(out_ref.dtype)
            else:
                out_ref[...] = act.astype(out_ref.dtype)

    return kernel


def heat_kernel_layer(coeff, pn, x, *, hk_threshold, mask_scale,
                      apply_log_softmax, mask_dtype=jnp.bfloat16,
                      tile_rows=128, tile_k=128):
    """One GraphConvolution2_w layer (+ fused relu/mask[/log_softmax])."""
    m1, n, _ = pn.shape
    f = x.shape[1]
    tm = min(tile_rows, n)
    tk = min(tile_k, n)
    assert n % tm == 0 and n % tk == 0, "N must be divisible by the tile sizes"

    kernel = _make_heat_layer_kernel(m1, hk_threshold, mask_scale,
                                     apply_log_softmax)
    grid = (n // tm, n // tk)

    out, mask = pl.pallas_call(
        kernel,
        out_shape=(
            jax.ShapeDtypeStruct((n, f), jnp.float32),   # activation / logits
            jax.ShapeDtypeStruct((n, f), mask_dtype),    # rdp-style mask
        ),
        grid_spec=pltpu.PrefetchScalarGridSpec(
            num_scalar_prefetch=0,
            grid=grid,
            in_specs=[
                pl.BlockSpec((tm, m1), lambda i, k: (i, 0)),        # coeffs
                pl.BlockSpec((m1, tm, tk), lambda i, k: (0, i, k)),  # P_n basis
                pl.BlockSpec((tk, f), lambda i, k: (k, 0)),          # features
            ],
            out_specs=(
                pl.BlockSpec((tm, f), lambda i, k: (i, 0)),
                pl.BlockSpec((tm, f), lambda i, k: (i, 0)),
            ),
            scratch_shapes=[pltpu.VMEM((tm, f), jnp.float32)],
        ),
        compiler_params=pltpu.CompilerParams(
            dimension_semantics=("parallel", "arbitrary")),
    )(coeff, pn, x)
    return out, mask


# --------------------------------------------------------------------------- #
# Host-side helpers (tiny scalar math / basis construction)
# --------------------------------------------------------------------------- #
def hermite_coefficients(t, m):
    """c[:, n] = exp(t^2/4) * (-t/2)^n / n!  (matches compute_heat_kernel_hermite)."""
    t = t.reshape(-1, 1).astype(jnp.float32)               # (N, 1)
    base = -t / 2.0
    pow_terms = jnp.concatenate([jnp.ones_like(base)] + [base] * m, axis=1)
    powers = jnp.cumprod(pow_terms, axis=1)                 # (N, m+1): base^n
    fact = jnp.cumprod(jnp.maximum(
        jnp.arange(0, m + 1, dtype=jnp.float32), 1.0))      # n! with 0! = 1
    return jnp.exp(t ** 2 / 4.0) * powers / fact[None, :]


def build_hermite_basis(lap, m):
    """Physicists' Hermite polynomials of the Laplacian: H_0=I, H_1=2L, ..."""
    n = lap.shape[0]
    h = [jnp.eye(n, dtype=jnp.float32)]
    if m >= 1:
        h.append(2.0 * lap)
    for k in range(2, m + 1):
        h.append(2.0 * lap @ h[-1] - 2.0 * (k - 1) * h[-2])
    return jnp.stack(h, axis=0)                              # (m+1, N, N)


def asap2_w_forward(x, pn, t1, t2, *, dropout, hk_threshold):
    """Full ASAP2_w.forward (eval mode). Returns (log_softmax, t2, f, rdp, rdp2)."""
    m = pn.shape[0] - 1
    c1 = hermite_coefficients(t1, m)
    c2 = hermite_coefficients(t2, m)
    inv_keep = 1.0 / (1.0 - dropout)

    x2, rdp = heat_kernel_layer(c1, pn, x, hk_threshold=hk_threshold,
                                mask_scale=inv_keep, apply_log_softmax=False)
    out, rdp2 = heat_kernel_layer(c2, pn, x2, hk_threshold=hk_threshold,
                                  mask_scale=1.0, apply_log_softmax=True)
    return out, t2, x2, rdp, rdp2


# --------------------------------------------------------------------------- #
# Pure-JAX reference (mirrors the kernel math, bf16 MXU inputs included)
# --------------------------------------------------------------------------- #
def _layer_reference(coeff, pn, x_in, hk_threshold, mask_scale, apply_log_softmax):
    hk = jnp.sum(coeff.T[:, :, None] * pn, axis=0)
    hk = jnp.where(hk < hk_threshold, 0.0, hk)
    pre = jnp.dot(hk.astype(jnp.bfloat16), x_in.astype(jnp.bfloat16),
                  preferred_element_type=jnp.float32)
    relu_mask = (pre > 0.0).astype(jnp.float32)
    act = pre * relu_mask
    mask = relu_mask * mask_scale
    out = jax.nn.log_softmax(act, axis=1) if apply_log_softmax else act
    return out, mask


# --------------------------------------------------------------------------- #
if __name__ == "__main__":
    key = jax.random.PRNGKey(0)
    kx, kadj = jax.random.split(key, 2)

    # Small but TPU-friendly shapes: N ROIs, F used features, degree-m basis.
    N, F, M = 256, 128, 5
    DROPOUT = 0.5
    HK_THRESHOLD = 1e-5

    # Node features and a random symmetric normalized graph Laplacian.
    x = jax.random.normal(kx, (N, F), jnp.float32)
    a = jax.random.uniform(kadj, (N, N), jnp.float32)
    a = (a + a.T) * 0.5
    a = a - jnp.diag(jnp.diag(a))
    deg = jnp.sum(a, axis=1)
    dis = 1.0 / jnp.sqrt(jnp.maximum(deg, 1e-6))
    lap = jnp.eye(N, dtype=jnp.float32) - dis[:, None] * a * dis[None, :]
    pn = build_hermite_basis(lap, M)                     # (M+1, N, N)

    # Per-node time parameters of gc1 / gc2 (Parameter init: fill(-2.0)).
    t1 = jnp.full((N,), -2.0, jnp.float32)
    t2 = jnp.full((N,), -2.0, jnp.float32)

    out, t_out, f_state, rdp, rdp2 = asap2_w_forward(
        x, pn, t1, t2, dropout=DROPOUT, hk_threshold=HK_THRESHOLD)
    jax.block_until_ready((out, t_out, f_state, rdp, rdp2))

    # --- correctness checks vs. pure-JAX reference ---
    c1 = hermite_coefficients(t1, M)
    c2 = hermite_coefficients(t2, M)
    ref_x2, ref_rdp = _layer_reference(c1, pn, x, HK_THRESHOLD,
                                       1.0 / (1.0 - DROPOUT), False)
    # Layer-2 reference is evaluated from the kernel's own x2 so that only the
    # layer-2 kernel math is being checked (avoids compounding tiny bf16
    # rounding-boundary differences from layer 1).
    ref_out, ref_rdp2 = _layer_reference(c2, pn, f_state, HK_THRESHOLD, 1.0, True)

    assert jnp.allclose(f_state, ref_x2, atol=5e-3, rtol=5e-3)
    assert jnp.allclose(out, ref_out, atol=5e-3, rtol=5e-3)
    # Masks are thresholded quantities; allow a vanishing fraction of boundary
    # flips caused by f32 accumulation-order differences.
    rdp_match = jnp.mean((rdp.astype(jnp.float32) == ref_rdp).astype(jnp.float32))
    rdp2_match = jnp.mean((rdp2.astype(jnp.float32) == ref_rdp2).astype(jnp.float32))
    assert float(rdp_match) > 0.999
    assert float(rdp2_match) > 0.999
    assert jnp.allclose(t_out, t2)

    print("KERNEL_OK")
</pallas_src>

<mosaic_0001>
module attributes {stable_mosaic.version = 11 : i64} {
  func.func @kernel(%arg0: i32, %arg1: i32, %arg2: memref<128x6xf32, #tpu.memory_space<vmem>>, %arg3: memref<6x128x128xf32, #tpu.memory_space<vmem>>, %arg4: memref<128x128xf32, #tpu.memory_space<vmem>>, %arg5: memref<128x128xf32, #tpu.memory_space<vmem>>, %arg6: memref<128x128xbf16, #tpu.memory_space<vmem>>, %arg7: memref<128x128xf32, #tpu.memory_space<vmem>>) attributes {dimension_semantics = [#tpu.dimension_semantics<parallel>, #tpu.dimension_semantics<arbitrary>], iteration_bounds = array<i64: 2, 2>, scalar_prefetch = 0 : i64, scratch_operands = 1 : i64, tpu.core_type = #tpu.core_type<tc>, window_params = [{transform_indices = @transform_0, window_bounds = array<i64: 128, 6>}, {transform_indices = @transform_1, window_bounds = array<i64: 6, 128, 128>}, {transform_indices = @transform_2, window_bounds = array<i64: 128, 128>}, {transform_indices = @transform_3, window_bounds = array<i64: 128, 128>}, {transform_indices = @transform_4, window_bounds = array<i64: 128, 128>}]} {
    %c0_i32 = arith.constant 0 : i32
    %0 = arith.cmpi eq, %arg1, %c0_i32 : i32
    %1 = arith.extui %0 : i1 to i32
    %c0_i32_0 = arith.constant 0 : i32
    %2 = arith.cmpi ne, %1, %c0_i32_0 : i32
    scf.if %2 {
      %cst_24 = arith.constant 0.000000e+00 : f32
      %53 = vector.broadcast %cst_24 : f32 to vector<128x128xf32>
      %c0_25 = arith.constant 0 : index
      %c0_26 = arith.constant 0 : index
      %54 = vector.load %arg7[%c0_25, %c0_26] : memref<128x128xf32, #tpu.memory_space<vmem>>, vector<128x128xf32>
      tpu.vector_store %arg7[%c0_25, %c0_26], %53 {strides = array<i32>} : memref<128x128xf32, #tpu.memory_space<vmem>>, vector<128x128xf32>,
    } else {
    }
    %c0 = arith.constant 0 : index
    %c0_1 = arith.constant 0 : index
    %3 = vector.load %arg2[%c0, %c0_1] : memref<128x6xf32, #tpu.memory_space<vmem>>, vector<128x6xf32>
    %4 = vector.extract_strided_slice %3 {offsets = [0, 0], sizes = [128, 1], strides = [1, 1]} : vector<128x6xf32> to vector<128x1xf32>
    %c0_2 = arith.constant 0 : index
    %c0_3 = arith.constant 0 : index
    %c0_4 = arith.constant 0 : index
    %5 = vector.load %arg3[%c0_2, %c0_3, %c0_4] : memref<6x128x128xf32, #tpu.memory_space<vmem>>, vector<1x128x128xf32>
    %6 = vector.shape_cast %5 : vector<1x128x128xf32> to vector<128x128xf32>
    %7 = vector.broadcast %4 : vector<128x1xf32> to vector<128x128xf32>
    %8 = arith.mulf %7, %6 : vector<128x128xf32>
    %9 = vector.extract_strided_slice %3 {offsets = [0, 1], sizes = [128, 1], strides = [1, 1]} : vector<128x6xf32> to vector<128x1xf32>
    %c1 = arith.constant 1 : index
    %c0_5 = arith.constant 0 : index
    %c0_6 = arith.constant 0 : index
    %10 = vector.load %arg3[%c1, %c0_5, %c0_6] : memref<6x128x128xf32, #tpu.memory_space<vmem>>, vector<1x128x128xf32>
    %11 = vector.shape_cast %10 : vector<1x128x128xf32> to vector<128x128xf32>
    %12 = vector.broadcast %9 : vector<128x1xf32> to vector<128x128xf32>
    %13 = arith.mulf %12, %11 : vector<128x128xf32>
    %14 = arith.addf %8, %13 : vector<128x128xf32>
    %15 = vector.extract_strided_slice %3 {offsets = [0, 2], sizes = [128, 1], strides = [1, 1]} : vector<128x6xf32> to vector<128x1xf32>
    %c2 = arith.constant 2 : index
    %c0_7 = arith.constant 0 : index
    %c0_8 = arith.constant 0 : index
    %16 = vector.load %arg3[%c2, %c0_7, %c0_8] : memref<6x128x128xf32, #tpu.memory_space<vmem>>, vector<1x128x128xf32>
    %17 = vector.shape_cast %16 : vector<1x128x128xf32> to vector<128x128xf32>
    %18 = vector.broadcast %15 : vector<128x1xf32> to vector<128x128xf32>
    %19 = arith.mulf %18, %17 : vector<128x128xf32>
    %20 = arith.addf %14, %19 : vector<128x128xf32>
    %21 = vector.extract_strided_slice %3 {offsets = [0, 3], sizes = [128, 1], strides = [1, 1]} : vector<128x6xf32> to vector<128x1xf32>
    %c3 = arith.constant 3 : index
    %c0_9 = arith.constant 0 : index
    %c0_10 = arith.constant 0 : index
    %22 = vector.load %arg3[%c3, %c0_9, %c0_10] : memref<6x128x128xf32, #tpu.memory_space<vmem>>, vector<1x128x128xf32>
    %23 = vector.shape_cast %22 : vector<1x128x128xf32> to vector<128x128xf32>
    %24 = vector.broadcast %21 : vector<128x1xf32> to vector<128x128xf32>
    %25 = arith.mulf %24, %23 : vector<128x128xf32>
    %26 = arith.addf %20, %25 : vector<128x128xf32>
    %27 = vector.extract_strided_slice %3 {offsets = [0, 4], sizes = [128, 1], strides = [1, 1]} : vector<128x6xf32> to vector<128x1xf32>
    %c4 = arith.constant 4 : index
    %c0_11 = arith.constant 0 : index
    %c0_12 = arith.constant 0 : index
    %28 = vector.load %arg3[%c4, %c0_11, %c0_12] : memref<6x128x128xf32, #tpu.memory_space<vmem>>, vector<1x128x128xf32>
    %29 = vector.shape_cast %28 : vector<1x128x128xf32> to vector<128x128xf32>
    %30 = vector.broadcast %27 : vector<128x1xf32> to vector<128x128xf32>
    %31 = arith.mulf %30, %29 : vector<128x128xf32>
    %32 = arith.addf %26, %31 : vector<128x128xf32>
    %33 = vector.extract_strided_slice %3 {offsets = [0, 5], sizes = [128, 1], strides = [1, 1]} : vector<128x6xf32> to vector<128x1xf32>
    %c5 = arith.constant 5 : index
    %c0_13 = arith.constant 0 : index
    %c0_14 = arith.constant 0 : index
    %34 = vector.load %arg3[%c5, %c0_13, %c0_14] : memref<6x128x128xf32, #tpu.memory_space<vmem>>, vector<1x128x128xf32>
    %35 = vector.shape_cast %34 : vector<1x128x128xf32> to vector<128x128xf32>
    %36 = vector.broadcast %33 : vector<128x1xf32> to vector<128x128xf32>
    %37 = arith.mulf %36, %35 : vector<128x128xf32>
    %38 = arith.addf %32, %37 : vector<128x128xf32>
    %cst = arith.constant 9.99999974E-6 : f32
    %39 = vector.broadcast %cst : f32 to vector<128x128xf32>
    %40 = arith.cmpf olt, %38, %39 : vector<128x128xf32>
    %cst_15 = arith.constant 0.000000e+00 : f32
    %41 = vector.broadcast %cst_15 : f32 to vector<128x128xf32>
    %42 = arith.select %40, %41, %38 : vector<128x128xi1>, vector<128x128xf32>
    %c0_16 = arith.constant 0 : index
    %c0_17 = arith.constant 0 : index
    %43 = vector.load %arg7[%c0_16, %c0_17] : memref<128x128xf32, #tpu.memory_space<vmem>>, vector<128x128xf32>
    %44 = arith.truncf %42 : vector<128x128xf32> to vector<128x128xbf16>
    %c0_18 = arith.constant 0 : index
    %c0_19 = arith.constant 0 : index
    %45 = vector.load %arg4[%c0_18, %c0_19] : memref<128x128xf32, #tpu.memory_space<vmem>>, vector<128x128xf32>
    %46 = arith.truncf %45 : vector<128x128xf32> to vector<128x128xbf16>
    %cst_20 = arith.constant dense<0.000000e+00> : vector<128x128xf32>
    %47 = tpu.matmul %44, %46, %cst_20 {dimension_numbers = #tpu.dot_dimension_numbers<[1], [0], [0], [1], [0, 0, 1, 1], [], []>} : vector<128x128xbf16>, vector<128x128xbf16>, vector<128x128xf32> -> vector<128x128xf32>
    %48 = arith.addf %43, %47 : vector<128x128xf32>
    %c0_21 = arith.constant 0 : index
    %c0_22 = arith.constant 0 : index
    %49 = vector.load %arg7[%c0_21, %c0_22] : memref<128x128xf32, #tpu.memory_space<vmem>>, vector<128x128xf32>
    tpu.vector_store %arg7[%c0_21, %c0_22], %48 {strides = array<i32>} : memref<128x128xf32, #tpu.memory_space<vmem>>, vector<128x128xf32>,
    %c1_i32 = arith.constant 1 : i32
    %50 = arith.cmpi eq, %arg1, %c1_i32 : i32
    %51 = arith.extui %50 : i1 to i32
    %c0_i32_23 = arith.constant 0 : i32
    %52 = arith.cmpi ne, %51, %c0_i32_23 : i32
    scf.if %52 {
      %c0_24 = arith.constant 0 : index
      %c0_25 = arith.constant 0 : index
      %53 = vector.load %arg7[%c0_24, %c0_25] : memref<128x128xf32, #tpu.memory_space<vmem>>, vector<128x128xf32>
      %cst_26 = arith.constant 0.000000e+00 : f32
      %54 = vector.broadcast %cst_26 : f32 to vector<128x128xf32>
      %55 = arith.cmpf ogt, %53, %54 : vector<128x128xf32>
      %56 = arith.extui %55 : vector<128x128xi1> to vector<128x128xi32>
      %57 = arith.sitofp %56 : vector<128x128xi32> to vector<128x128xf32>
      %58 = arith.mulf %53, %57 : vector<128x128xf32>
      %cst_27 = arith.constant 2.000000e+00 : f32
      %59 = vector.broadcast %cst_27 : f32 to vector<128x128xf32>
      %60 = arith.mulf %57, %59 : vector<128x128xf32>
      %61 = arith.truncf %60 : vector<128x128xf32> to vector<128x128xbf16>
      %c0_28 = arith.constant 0 : index
      %c0_29 = arith.constant 0 : index
      %62 = vector.load %arg6[%c0_28, %c0_29] : memref<128x128xbf16, #tpu.memory_space<vmem>>, vector<128x128xbf16>
      tpu.vector_store %arg6[%c0_28, %c0_29], %61 {strides = array<i32>} : memref<128x128xbf16, #tpu.memory_space<vmem>>, vector<128x128xbf16>,
      %c0_30 = arith.constant 0 : index
      %c0_31 = arith.constant 0 : index
      %63 = vector.load %arg5[%c0_30, %c0_31] : memref<128x128xf32, #tpu.memory_space<vmem>>, vector<128x128xf32>
      tpu.vector_store %arg5[%c0_30, %c0_31], %58 {strides = array<i32>} : memref<128x128xf32, #tpu.memory_space<vmem>>, vector<128x128xf32>,
    } else {
    }
    return
  }
  func.func @transform_0(%arg0: i32, %arg1: i32) -> (i32, i32) {
    %c0_i32 = arith.constant 0 : i32
    %c0_i32_0 = arith.constant 0 : i32
    return %arg0, %c0_i32 : i32, i32
  }
  func.func @transform_1(%arg0: i32, %arg1: i32) -> (i32, i32, i32) {
    %c0_i32 = arith.constant 0 : i32
    %c0_i32_0 = arith.constant 0 : i32
    return %c0_i32, %arg0, %arg1 : i32, i32, i32
  }
  func.func @transform_2(%arg0: i32, %arg1: i32) -> (i32, i32) {
    %c0_i32 = arith.constant 0 : i32
    %c0_i32_0 = arith.constant 0 : i32
    return %arg1, %c0_i32 : i32, i32
  }
  func.func @transform_3(%arg0: i32, %arg1: i32) -> (i32, i32) {
    %c0_i32 = arith.constant 0 : i32
    %c0_i32_0 = arith.constant 0 : i32
    return %arg0, %c0_i32 : i32, i32
  }
  func.func @transform_4(%arg0: i32, %arg1: i32) -> (i32, i32) {
    %c0_i32 = arith.constant 0 : i32
    %c0_i32_0 = arith.constant 0 : i32
    return %arg0, %c0_i32 : i32, i32
  }
}

</mosaic_0001>

<llo_original>
// kernel: tpu_custom_call.1
$region0: #{tpu_custom_call.1}
  #allocation0 [shape = 'u32[]', space=smem, size = 0x4, offset = 0x4, fixed_abs, tag = 'smem constant byte address 0x4 - core index']
  #allocation1 [shape = 'u32[144,128]{1,0:T(1,128)}', space=vmem, size = 0x12000, scoped, tag = 'internal scratch']
  #allocation2 [shape = 'f32[128,128]{1,0:T(8,128)}', space=vmem, size = 0x10000, scoped, tag = 'scratch operand']
  #allocation11 [shape = 's32[]', space=sflag, size = 0x4, offset = 0, fixed_abs, tag = 'sflag constant byte address 0x0 - dummy sync flag']
  %s0 = inlined_call_operand.vmem [shape: f32[256,6], index: 0, kind: input, shape index: {}]
  %s1 = inlined_call_operand.hbm [shape: f32[6,256,256], index: 1, kind: input, shape index: {}]
  %s2 = inlined_call_operand.hbm [shape: f32[256,128], index: 2, kind: input, shape index: {}]
  %s3 = inlined_call_operand.hbm [shape: f32[256,128], index: 3, kind: output, shape index: {0}]
  %s4 = inlined_call_operand.hbm [shape: bf16[256,128], index: 4, kind: output, shape index: {1}]
  %5 = xla_tuple %s3, %s4
  %s6 = sld [smem:[#allocation0]]
  $region69: #{tpu_custom_call.1} parent=0
    _
  %s8 = ssub.s32 1, %s6
  %s9 = scalar_select 0, %s8, %s6
  $region1: #{tpu_custom_call.1} parent=0
    #allocation3 [shape = 'u8[786432]{0}', space=vmem, size = 0xc0000, scoped, tag = 'input window, operand 1']
    #allocation4 [shape = 's32[2]{0}', space=sflag, size = 0x8, scoped, tag = 'scoped memory for tpu_custom_call.1']
    #allocation5 [shape = 's32[2]{0}', space=sflag, size = 0x8, scoped, tag = 'scoped memory for tpu_custom_call.1']
    #allocation6 [shape = 'u8[131072]{0}', space=vmem, size = 0x20000, scoped, tag = 'input window, operand 2']
    #allocation7 [shape = 's32[2]{0}', space=sflag, size = 0x8, scoped, tag = 'scoped memory for tpu_custom_call.1']
    #allocation8 [shape = 'u8[131072]{0}', space=vmem, size = 0x20000, scoped, tag = 'output window, operand 0']
    #allocation9 [shape = 'u8[65536]{0}', space=vmem, size = 0x10000, scoped, tag = 'output window, operand 1']
    #allocation10 [shape = 's32[2]{0}', space=sflag, size = 0x8, scoped, tag = 'scoped memory for tpu_custom_call.1']
    %10 = vsyncpa [#allocation4], 0
    %s11 = scalar_lea.sflag [#allocation4], 1
    %12 = vsyncpa %s11, 0
    %13 = vsyncpa [#allocation7], 0
    %s14 = scalar_lea.sflag [#allocation7], 1
    %15 = vsyncpa %s14, 0
    %16 = vsyncpa [#allocation5], 0
    %s17 = scalar_lea.sflag [#allocation5], 1
    %18 = vsyncpa %s17, 0
    %19 = vsyncpa [#allocation10], 0
    %s20 = scalar_lea.sflag [#allocation10], 1
    %21 = vsyncpa %s20, 0
    loop: start=0, step=1, limit=6
    $region2: #{tpu_custom_call.1} parent=1 // loop_pre_header
      _
    $region3: #{tpu_custom_call.1} parent=1 // loop_header
      %s23 = sphi 0, %s27
      %p24 = scmp.ge.s32.totalorder %s23, 6
      %s30 = sphi 0, %s42
      %s31 = sphi 0, %s38
      %s32 = sphi 0, %s30
      %s33 = sphi 0, %s31
      %s34 = sphi 0, %s32
      %s35 = sphi 0, %s33
      %s45 = sphi 0, %s47
      %s48 = sphi 0, %s45
      %s49 = sphi 0, %s48
      %s65 = sphi 0, %s49
      %s73 = sphi 0, %s75
      %s76 = sphi 0, %s73
      %s77 = sphi 0, %s76
      %s93 = sphi 0, %s77
      %s99 = sphi 0, %s101
      %s102 = sphi 0, %s99
      %s103 = sphi 0, %s102
      %s119 = sphi 0, %s103
      %s125 = sphi 0, %s127
      %s128 = sphi 0, %s125
      %s129 = sphi 0, %s128
      %s145 = sphi 0, %s129
      %s151 = sphi 0, %s153
      %s154 = sphi 0, %s151
      %s155 = sphi 0, %s154
      %s171 = sphi 0, %s155
    $region4: #{tpu_custom_call.1} parent=1 // loop_header_branch
      %26 = sbr.rel (%p24) target = $region8
    $region5: #{tpu_custom_call.1} parent=1 // loop_body
      %s28 = ssub.s32 %s23, 1
      %s29 = ssub.s32 %s23, 2
      %s36 = sadd.s32 1, %s31
      %p37 = scmp.ge.s32.totalorder %s36, 2
      %s38 = scalar_select %p37, 0, %s36
      %s39 = sadd.s32 1, %s30
      %s40 = scalar_select %p37, %s39, %s30
      %p41 = scmp.ge.s32.totalorder %s40, 2
      %s42 = scalar_select %p41, 0, %s40
      %s43 = ssub.s32 %s30, %s42
      %p44 = scmp.eq.s32.totalorder %s43, 0
      %s46 = sadd.s32 %s45, 1
      %s47 = scalar_select %p44, %s45, %s46
      %p50 = pneg %p44
      %p51 = scmp.eq.s32.totalorder %s23, 3
      %p52 = por %p50, %p51
      %p53 = scmp.ne.s32.totalorder %s45, %s48
      %p54 = scmp.eq.s32.totalorder %s23, 0
      %p55 = por %p53, %p54
      %p56 = scmp.ne.s32.totalorder %s45, %s48
      %p57 = scmp.eq.s32.totalorder %s28, 3
      %p58 = por %p56, %p57
      %p59 = scmp.ne.s32.totalorder %s48, %s49
      %p60 = scmp.eq.s32.totalorder %s28, 0
      %p61 = por %p59, %p60
      %p62 = scmp.ne.s32.totalorder %s48, %s49
      %p63 = scmp.eq.s32.totalorder %s29, 3
      %p64 = por %p62, %p63
      %p66 = scmp.ne.s32.totalorder %s49, %s65
      %p67 = scmp.eq.s32.totalorder %s29, 0
      %p68 = por %p66, %p67
      %s69 = ssub.s32 %s30, %s42
      %s70 = ssub.s32 %s31, %s38
      %s71 = sor.u32 %s69, %s70
      %p72 = scmp.eq.s32.totalorder %s71, 0
      %s74 = sadd.s32 %s73, 1
      %s75 = scalar_select %p72, %s73, %s74
      %p78 = pneg %p72
      %p79 = scmp.eq.s32.totalorder %s23, 3
      %p80 = por %p78, %p79
      %p81 = scmp.ne.s32.totalorder %s73, %s76
      %p82 = scmp.eq.s32.totalorder %s23, 0
      %p83 = por %p81, %p82
      %p84 = scmp.ne.s32.totalorder %s73, %s76
      %p85 = scmp.eq.s32.totalorder %s28, 3
      %p86 = por %p84, %p85
      %p87 = scmp.ne.s32.totalorder %s76, %s77
      %p88 = scmp.eq.s32.totalorder %s28, 0
      %p89 = por %p87, %p88
      %p90 = scmp.ne.s32.totalorder %s76, %s77
      %p91 = scmp.eq.s32.totalorder %s29, 3
      %p92 = por %p90, %p91
      %p94 = scmp.ne.s32.totalorder %s77, %s93
      %p95 = scmp.eq.s32.totalorder %s29, 0
      %p96 = por %p94, %p95
      %s97 = ssub.s32 %s31, %s38
      %p98 = scmp.eq.s32.totalorder %s97, 0
      %s100 = sadd.s32 %s99, 1
      %s101 = scalar_select %p98, %s99, %s100
      %p104 = pneg %p98
      %p105 = scmp.eq.s32.totalorder %s23, 3
      %p106 = por %p104, %p105
      %p107 = scmp.ne.s32.totalorder %s99, %s102
      %p108 = scmp.eq.s32.totalorder %s23, 0
      %p109 = por %p107, %p108
      %p110 = scmp.ne.s32.totalorder %s99, %s102
      %p111 = scmp.eq.s32.totalorder %s28, 3
      %p112 = por %p110, %p111
      %p113 = scmp.ne.s32.totalorder %s102, %s103
      %p114 = scmp.eq.s32.totalorder %s28, 0
      %p115 = por %p113, %p114
      %p116 = scmp.ne.s32.totalorder %s102, %s103
      %p117 = scmp.eq.s32.totalorder %s29, 3
      %p118 = por %p116, %p117
      %p120 = scmp.ne.s32.totalorder %s103, %s119
      %p121 = scmp.eq.s32.totalorder %s29, 0
      %p122 = por %p120, %p121
      %s123 = ssub.s32 %s30, %s42
      %p124 = scmp.eq.s32.totalorder %s123, 0
      %s126 = sadd.s32 %s125, 1
      %s127 = scalar_select %p124, %s125, %s126
      %p130 = pneg %p124
      %p131 = scmp.eq.s32.totalorder %s23, 3
      %p132 = por %p130, %p131
      %p133 = scmp.ne.s32.totalorder %s125, %s128
      %p134 = scmp.eq.s32.totalorder %s23, 0
      %p135 = por %p133, %p134
      %p136 = scmp.ne.s32.totalorder %s125, %s128
      %p137 = scmp.eq.s32.totalorder %s28, 3
      %p138 = por %p136, %p137
      %p139 = scmp.ne.s32.totalorder %s128, %s129
      %p140 = scmp.eq.s32.totalorder %s28, 0
      %p141 = por %p139, %p140
      %p142 = scmp.ne.s32.totalorder %s128, %s129
      %p143 = scmp.eq.s32.totalorder %s29, 3
      %p144 = por %p142, %p143
      %p146 = scmp.ne.s32.totalorder %s129, %s145
      %p147 = scmp.eq.s32.totalorder %s29, 0
      %p148 = por %p146, %p147
      %s149 = ssub.s32 %s30, %s42
      %p150 = scmp.eq.s32.totalorder %s149, 0
      %s152 = sadd.s32 %s151, 1
      %s153 = scalar_select %p150, %s151, %s152
      %p156 = pneg %p150
      %p157 = scmp.eq.s32.totalorder %s23, 3
      %p158 = por %p156, %p157
      %p159 = scmp.ne.s32.totalorder %s151, %s154
      %p160 = scmp.eq.s32.totalorder %s23, 0
      %p161 = por %p159, %p160
      %p162 = scmp.ne.s32.totalorder %s151, %s154
      %p163 = scmp.eq.s32.totalorder %s28, 3
      %p164 = por %p162, %p163
      %p165 = scmp.ne.s32.totalorder %s154, %s155
      %p166 = scmp.eq.s32.totalorder %s28, 0
      %p167 = por %p165, %p166
      %p168 = scmp.ne.s32.totalorder %s154, %s155
      %p169 = scmp.eq.s32.totalorder %s29, 3
      %p170 = por %p168, %p169
      %p172 = scmp.ne.s32.totalorder %s155, %s171
      %p173 = scmp.eq.s32.totalorder %s29, 0
      %p174 = por %p172, %p173
      %p175 = scmp.le.s32.totalorder 1, %s23
      %p176 = scmp.lt.s32.totalorder %s23, 5
      %p177 = pnand %p175, %p176
      %p178 = pneg %p177
      // Predicated region
      $region9: #{tpu_custom_call.1} parent=5 // pred_check
        _
      $region10: #{tpu_custom_call.1} parent=5 // pred_check_branch
        %180 = sbr.rel (%p177) target = $region12
      $region11: #{tpu_custom_call.1} parent=5 // pred_region
        %s181 = ssub.s32 %s23, 1
      $region12: #{tpu_custom_call.1} parent=5 // pred_fallthru
        _
      %p182 = scmp.lt.s32.totalorder %s23, 4
      // Predicated region
      $region13: #{tpu_custom_call.1} parent=5 // pred_check
        %p183 = pneg %p182
      $region14: #{tpu_custom_call.1} parent=5 // pred_check_branch
        %185 = sbr.rel (%p183) target = $region16
      $region15: #{tpu_custom_call.1} parent=5 // pred_region
        // Predicated region
        $region17: #{tpu_custom_call.1} parent=15 // pred_check
          %p186 = pneg %p55
        $region18: #{tpu_custom_call.1} parent=15 // pred_check_branch
          %188 = sbr.rel (%p186) target = $region20
        $region19: #{tpu_custom_call.1} parent=15 // pred_region
          %s189 = smul.u32 16, %s30
          %p190 = scmp.lt.s32.totalorder %s189, 31
          %s191 = scalar_select %p190, %s189, 31
          %s192 = smul.addr %s191, 8
          %s193 = scalar_lea.vmem %s0, %s192
          %s194 = smul.u32 16, %s30
        $region20: #{tpu_custom_call.1} parent=15 // pred_fallthru
          _
        // Predicated region
        $region21: #{tpu_custom_call.1} parent=15 // pred_check
          %p195 = pneg %p83
        $region22: #{tpu_custom_call.1} parent=15 // pred_check_branch
          %197 = sbr.rel (%p195) target = $region24
        $region23: #{tpu_custom_call.1} parent=15 // pred_region
          #allocation12 [shape = 'u32[6]{0}', space=smem, size = 0x18, scoped, tag = 'DMA stride descriptor']
          %s198 = sand.u32 %s73, 1
          %s199 = scalar_lea.sflag [#allocation4], %s198
          %s200 = sand.u32 %s73, 1
          %s201 = smul.addr %s200, 768
          %s202 = scalar_lea.vmem [#allocation3], %s201
          %s203 = smul.u32 16, %s30
          %s205 = ssub.s32 12288, 12288
          %206 = vsyncadd %s199, %s205
          %s207 = smul.addr %s203, 2
          %s208 = sadd.s32 %s31, %s207
          %s209 = smul.addr %s208, 128
          %s210 = scalar_lea.hbm %s1, %s209
          %s212 = sshll.u32 1, 14
          %s213 = sxor.u32 4294967295, %s212
          %s215 = sld [smem:[#allocation0]]
          %s216 = sadd.s32 2, %s215
          %s218 = sshll.u32 7, 26
          %s219 = sxor.u32 4294967295, %s218
          %s220 = sand.u32 0, %s219
          %s221 = sshll.u32 %s216, 26
          %s222 = sor.u32 %s220, %s221
          %s223 = sshll.u32 %s202, 4
          %s224 = int_to_ptr.vmem [resolvable:$true] %s223
          %230 = sst [smem:[#allocation12]] 8192
          %s231 = scalar_lea.smem [#allocation12], 1
          %232 = sst [smem:[%s231]] 2048
          %s233 = scalar_lea.smem [#allocation12], 2
          %234 = sst [smem:[%s233]] 16
          %s235 = scalar_lea.smem [#allocation12], 3
          %236 = sst [smem:[%s235]] 256
          %s237 = scalar_lea.smem [#allocation12], 4
          %238 = sst [smem:[%s237]] 128
          %s239 = scalar_lea.smem [#allocation12], 5
          %240 = sst [smem:[%s239]] 8
          %242 = dma.general %s210, 12288, %s224, %s199, [#allocation11], [#allocation12], %s222, 0
        $region24: #{tpu_custom_call.1} parent=15 // pred_fallthru
          _
        // Predicated region
        $region25: #{tpu_custom_call.1} parent=15 // pred_check
          %p243 = pneg %p109
        $region26: #{tpu_custom_call.1} parent=15 // pred_check_branch
          %245 = sbr.rel (%p243) target = $region28
        $region27: #{tpu_custom_call.1} parent=15 // pred_region
          %s246 = sand.u32 %s99, 1
          %s247 = scalar_lea.sflag [#allocation7], %s246
          %s248 = sand.u32 %s99, 1
          %s249 = smul.addr %s248, 128
          %s250 = scalar_lea.vmem [#allocation6], %s249
          %s251 = smul.u32 16, %s31
          %s253 = ssub.s32 2048, 2048
          %254 = vsyncadd %s247, %s253
          %s255 = smul.addr %s251, 128
          %s256 = scalar_lea.hbm %s2, %s255
          %s257 = sshll.u32 %s250, 4
          %s258 = int_to_ptr.vmem [resolvable:$true] %s257
          %263 = dma.hbm_to_vmem [thread:$0]  %s256, 2048, %s258, %s247, 128, 128, 8
        $region28: #{tpu_custom_call.1} parent=15 // pred_fallthru
          _
      $region16: #{tpu_custom_call.1} parent=5 // pred_fallthru
        _
      %p264 = scmp.le.s32.totalorder 1, %s23
      %p265 = scmp.lt.s32.totalorder %s23, 5
      %p266 = pnand %p264, %p265
      %p267 = pneg %p266
      // Predicated region
      $region29: #{tpu_custom_call.1} parent=5 // pred_check
        _
      $region30: #{tpu_custom_call.1} parent=5 // pred_check_branch
        %269 = sbr.rel (%p266) target = $region32
      $region31: #{tpu_custom_call.1} parent=5 // pred_region
        %s270 = ssub.s32 %s23, 1
        %s271 = sand.u32 %s76, 1
        %s272 = scalar_lea.sflag [#allocation4], %s271
        %s273 = sand.u32 %s76, 1
        %s274 = smul.addr %s273, 768
        %s275 = scalar_lea.vmem [#allocation3], %s274
        // Predicated region
        $region33: #{tpu_custom_call.1} parent=31 // pred_check
          %p276 = pneg %p89
        $region34: #{tpu_custom_call.1} parent=31 // pred_check_branch
          %278 = sbr.rel (%p276) target = $region36
        $region35: #{tpu_custom_call.1} parent=31 // pred_region
          %279 = dma.done %s272, 12288
        $region36: #{tpu_custom_call.1} parent=31 // pred_fallthru
          _
        %s280 = sand.u32 %s102, 1
        %s281 = scalar_lea.sflag [#allocation7], %s280
        %s282 = sand.u32 %s102, 1
        %s283 = smul.addr %s282, 128
        %s284 = scalar_lea.vmem [#allocation6], %s283
        // Predicated region
        $region37: #{tpu_custom_call.1} parent=31 // pred_check
          %p285 = pneg %p115
        $region38: #{tpu_custom_call.1} parent=31 // pred_check_branch
          %287 = sbr.rel (%p285) target = $region40
        $region39: #{tpu_custom_call.1} parent=31 // pred_region
          %288 = dma.done %s281, 2048
        $region40: #{tpu_custom_call.1} parent=31 // pred_fallthru
          _
        %s289 = smul.u32 16, %s32
        %p290 = scmp.lt.s32.totalorder %s289, 31
        %s291 = scalar_select %p290, %s289, 31
        %s292 = smul.addr %s291, 8
        %s293 = scalar_lea.vmem %s0, %s292
        %p294 = pneg %p61
        %p295 = pneg %p58
        %s296 = sand.u32 %s76, 1
        %s297 = scalar_lea.sflag [#allocation4], %s296
        %s298 = sand.u32 %s76, 1
        %s299 = smul.addr %s298, 768
        %s300 = scalar_lea.vmem [#allocation3], %s299
        %p301 = pneg %p89
        %p302 = pneg %p86
        %s303 = sand.u32 %s102, 1
        %s304 = scalar_lea.sflag [#allocation7], %s303
        %s305 = sand.u32 %s102, 1
        %s306 = smul.addr %s305, 128
        %s307 = scalar_lea.vmem [#allocation6], %s306
        %p308 = pneg %p115
        %p309 = pneg %p112
        %p310 = pneg %p141
        %p311 = pneg %p138
        %s312 = sand.u32 %s128, 1
        %s313 = scalar_lea.sflag [#allocation5], %s312
        %s314 = sand.u32 %s128, 1
        %s315 = smul.addr %s314, 128
        %s316 = scalar_lea.vmem [#allocation8], %s315
        %p317 = pneg %p167
        %p318 = pneg %p164
        %s319 = sand.u32 %s154, 1
        %s320 = scalar_lea.sflag [#allocation10], %s319
        %s321 = sand.u32 %s154, 1
        %s322 = smul.addr %s321, 64
        %s323 = scalar_lea.vmem [#allocation9], %s322
        %s324 = smul.u32 16, %s32
        %p325 = scmp.lt.s32.totalorder %s324, 31
        %s326 = scalar_select %p325, %s324, 31
        %s327 = smul.addr %s326, 8
        %s328 = scalar_lea.vmem %s0, %s327
        %s329 = smul.u32 16, %s32
        %s330 = smul.u32 16, %s32
        %s331 = smul.u32 16, %s33
        %s332 = smul.u32 16, %s32
        %s333 = smul.u32 16, %s32
        %p335 = scmp.eq.s32.totalorder %s33, 0
        // Predicated region
        $region41: #{tpu_custom_call.1} parent=31 // pred_check
          %p336 = pneg %p335
        $region42: #{tpu_custom_call.1} parent=31 // pred_check_branch
          %338 = sbr.rel (%p336) target = $region44
        $region43: #{tpu_custom_call.1} parent=31 // pred_region
          %339 = vst [vmem:[#allocation2] sm:$0xff] 0.0
          %340 = vst [vmem:[#allocation2 + $0x8] sm:$0xff] 0.0
          %341 = vst [vmem:[#allocation2 + $0x10] sm:$0xff] 0.0
          %342 = vst [vmem:[#allocation2 + $0x18] sm:$0xff] 0.0
          %343 = vst [vmem:[#allocation2 + $0x20] sm:$0xff] 0.0
          %344 = vst [vmem:[#allocation2 + $0x28] sm:$0xff] 0.0
          %345 = vst [vmem:[#allocation2 + $0x30] sm:$0xff] 0.0
          %346 = vst [vmem:[#allocation2 + $0x38] sm:$0xff] 0.0
          %347 = vst [vmem:[#allocation2 + $0x40] sm:$0xff] 0.0
          %348 = vst [vmem:[#allocation2 + $0x48] sm:$0xff] 0.0
          %349 = vst [vmem:[#allocation2 + $0x50] sm:$0xff] 0.0
          %350 = vst [vmem:[#allocation2 + $0x58] sm:$0xff] 0.0
          %351 = vst [vmem:[#allocation2 + $0x60] sm:$0xff] 0.0
          %352 = vst [vmem:[#allocation2 + $0x68] sm:$0xff] 0.0
          %353 = vst [vmem:[#allocation2 + $0x70] sm:$0xff] 0.0
          %354 = vst [vmem:[#allocation2 + $0x78] sm:$0xff] 0.0
        $region44: #{tpu_custom_call.1} parent=31 // pred_fallthru
          _
        %v355 = vld [vmem:[%s328] sm:$0xff]
        %v356 = vld [vmem:[%s328 + $0x8] sm:$0xff]
        %v357 = vld [vmem:[%s328 + $0x10] sm:$0xff]
        %v358 = vld [vmem:[%s328 + $0x18] sm:$0xff]
        %v359 = vld [vmem:[%s328 + $0x20] sm:$0xff]
        %v360 = vld [vmem:[%s328 + $0x28] sm:$0xff]
        %v361 = vld [vmem:[%s328 + $0x30] sm:$0xff]
        %v362 = vld [vmem:[%s328 + $0x38] sm:$0xff]
        %v363 = vld [vmem:[%s328 + $0x40] sm:$0xff]
        %v364 = vld [vmem:[%s328 + $0x48] sm:$0xff]
        %v365 = vld [vmem:[%s328 + $0x50] sm:$0xff]
        %v366 = vld [vmem:[%s328 + $0x58] sm:$0xff]
        %v367 = vld [vmem:[%s328 + $0x60] sm:$0xff]
        %v368 = vld [vmem:[%s328 + $0x68] sm:$0xff]
        %v369 = vld [vmem:[%s328 + $0x70] sm:$0xff]
        %v370 = vld [vmem:[%s328 + $0x78] sm:$0xff]
        %v371 = vld [vmem:[%s275] sm:$0xff]
        %v372 = vld [vmem:[%s275 + $0x8] sm:$0xff]
        %v373 = vld [vmem:[%s275 + $0x10] sm:$0xff]
        %v374 = vld [vmem:[%s275 + $0x18] sm:$0xff]
        %v375 = vld [vmem:[%s275 + $0x20] sm:$0xff]
        %v376 = vld [vmem:[%s275 + $0x28] sm:$0xff]
        %v377 = vld [vmem:[%s275 + $0x30] sm:$0xff]
        %v378 = vld [vmem:[%s275 + $0x38] sm:$0xff]
        %v379 = vld [vmem:[%s275 + $0x40] sm:$0xff]
        %v380 = vld [vmem:[%s275 + $0x48] sm:$0xff]
        %v381 = vld [vmem:[%s275 + $0x50] sm:$0xff]
        %v382 = vld [vmem:[%s275 + $0x58] sm:$0xff]
        %v383 = vld [vmem:[%s275 + $0x60] sm:$0xff]
        %v384 = vld [vmem:[%s275 + $0x68] sm:$0xff]
        %v385 = vld [vmem:[%s275 + $0x70] sm:$0xff]
        %v386 = vld [vmem:[%s275 + $0x78] sm:$0xff]
        %388 = vset.pattern.permute.xlu0 0
        %389 = vperm.xlu0 %388, %v355
        %v390 = vpop.permute.xlu0 %389
        %393 = vset.pattern.permute.xlu0 0
        %394 = vperm.xlu0 %393, %v356
        %v395 = vpop.permute.xlu0 %394
        %398 = vset.pattern.permute.xlu0 0
        %399 = vperm.xlu0 %398, %v357
        %v400 = vpop.permute.xlu0 %399
        %403 = vset.pattern.permute.xlu0 0
        %404 = vperm.xlu0 %403, %v358
        %v405 = vpop.permute.xlu0 %404
        %408 = vset.pattern.permute.xlu0 0
        %409 = vperm.xlu0 %408, %v359
        %v410 = vpop.permute.xlu0 %409
        %413 = vset.pattern.permute.xlu0 0
        %414 = vperm.xlu0 %413, %v360
        %v415 = vpop.permute.xlu0 %414
        %418 = vset.pattern.permute.xlu0 0
        %419 = vperm.xlu0 %418, %v361
        %v420 = vpop.permute.xlu0 %419
        %423 = vset.pattern.permute.xlu0 0
        %424 = vperm.xlu0 %423, %v362
        %v425 = vpop.permute.xlu0 %424
        %428 = vset.pattern.permute.xlu0 0
        %429 = vperm.xlu0 %428, %v363
        %v430 = vpop.permute.xlu0 %429
        %433 = vset.pattern.permute.xlu0 0
        %434 = vperm.xlu0 %433, %v364
        %v435 = vpop.permute.xlu0 %434
        %438 = vset.pattern.permute.xlu0 0
        %439 = vperm.xlu0 %438, %v365
        %v440 = vpop.permute.xlu0 %439
        %443 = vset.pattern.permute.xlu0 0
        %444 = vperm.xlu0 %443, %v366
        %v445 = vpop.permute.xlu0 %444
        %448 = vset.pattern.permute.xlu0 0
        %449 = vperm.xlu0 %448, %v367
        %v450 = vpop.permute.xlu0 %449
        %453 = vset.pattern.permute.xlu0 0
        %454 = vperm.xlu0 %453, %v368
        %v455 = vpop.permute.xlu0 %454
        %458 = vset.pattern.permute.xlu0 0
        %459 = vperm.xlu0 %458, %v369
        %v460 = vpop.permute.xlu0 %459
        %463 = vset.pattern.permute.xlu0 0
        %464 = vperm.xlu0 %463, %v370
        %v465 = vpop.permute.xlu0 %464
        %v467 = vmul.f32 %v390, %v371
        %v468 = vmul.f32 %v395, %v372
        %v469 = vmul.f32 %v400, %v373
        %v470 = vmul.f32 %v405, %v374
        %v471 = vmul.f32 %v410, %v375
        %v472 = vmul.f32 %v415, %v376
        %v473 = vmul.f32 %v420, %v377
        %v474 = vmul.f32 %v425, %v378
        %v475 = vmul.f32 %v430, %v379
        %v476 = vmul.f32 %v435, %v380
        %v477 = vmul.f32 %v440, %v381
        %v478 = vmul.f32 %v445, %v382
        %v479 = vmul.f32 %v450, %v383
        %v480 = vmul.f32 %v455, %v384
        %v481 = vmul.f32 %v460, %v385
        %v482 = vmul.f32 %v465, %v386
        %s483 = scalar_lea.vmem %s275, 128 [#allocation3]
        %v484 = vld [vmem:[%s483] sm:$0xff]
        %v485 = vld [vmem:[%s483 + $0x8] sm:$0xff]
        %v486 = vld [vmem:[%s483 + $0x10] sm:$0xff]
        %v487 = vld [vmem:[%s483 + $0x18] sm:$0xff]
        %v488 = vld [vmem:[%s483 + $0x20] sm:$0xff]
        %v489 = vld [vmem:[%s483 + $0x28] sm:$0xff]
        %v490 = vld [vmem:[%s483 + $0x30] sm:$0xff]
        %v491 = vld [vmem:[%s483 + $0x38] sm:$0xff]
        %v492 = vld [vmem:[%s483 + $0x40] sm:$0xff]
        %v493 = vld [vmem:[%s483 + $0x48] sm:$0xff]
        %v494 = vld [vmem:[%s483 + $0x50] sm:$0xff]
        %v495 = vld [vmem:[%s483 + $0x58] sm:$0xff]
        %v496 = vld [vmem:[%s483 + $0x60] sm:$0xff]
        %v497 = vld [vmem:[%s483 + $0x68] sm:$0xff]
        %v498 = vld [vmem:[%s483 + $0x70] sm:$0xff]
        %v499 = vld [vmem:[%s483 + $0x78] sm:$0xff]
        %500 = vset.pattern.permute.xlu0 1
        %501 = vperm.xlu0 %500, %v355
        %v502 = vpop.permute.xlu0 %501
        %504 = vset.pattern.permute.xlu0 1
        %505 = vperm.xlu0 %504, %v356
        %v506 = vpop.permute.xlu0 %505
        %508 = vset.pattern.permute.xlu0 1
        %509 = vperm.xlu0 %508, %v357
        %v510 = vpop.permute.xlu0 %509
        %512 = vset.pattern.permute.xlu0 1
        %513 = vperm.xlu0 %512, %v358
        %v514 = vpop.permute.xlu0 %513
        %516 = vset.pattern.permute.xlu0 1
        %517 = vperm.xlu0 %516, %v359
        %v518 = vpop.permute.xlu0 %517
        %520 = vset.pattern.permute.xlu0 1
        %521 = vperm.xlu0 %520, %v360
        %v522 = vpop.permute.xlu0 %521
        %524 = vset.pattern.permute.xlu0 1
        %525 = vperm.xlu0 %524, %v361
        %v526 = vpop.permute.xlu0 %525
        %528 = vset.pattern.permute.xlu0 1
        %529 = vperm.xlu0 %528, %v362
        %v530 = vpop.permute.xlu0 %529
        %532 = vset.pattern.permute.xlu0 1
        %533 = vperm.xlu0 %532, %v363
        %v534 = vpop.permute.xlu0 %533
        %536 = vset.pattern.permute.xlu0 1
        %537 = vperm.xlu0 %536, %v364
        %v538 = vpop.permute.xlu0 %537
        %540 = vset.pattern.permute.xlu0 1
        %541 = vperm.xlu0 %540, %v365
        %v542 = vpop.permute.xlu0 %541
        %544 = vset.pattern.permute.xlu0 1
        %545 = vperm.xlu0 %544, %v366
        %v546 = vpop.permute.xlu0 %545
        %548 = vset.pattern.permute.xlu0 1
        %549 = vperm.xlu0 %548, %v367
        %v550 = vpop.permute.xlu0 %549
        %552 = vset.pattern.permute.xlu0 1
        %553 = vperm.xlu0 %552, %v368
        %v554 = vpop.permute.xlu0 %553
        %556 = vset.pattern.permute.xlu0 1
        %557 = vperm.xlu0 %556, %v369
        %v558 = vpop.permute.xlu0 %557
        %560 = vset.pattern.permute.xlu0 1
        %561 = vperm.xlu0 %560, %v370
        %v562 = vpop.permute.xlu0 %561
        %v564 = vmul.f32 %v502, %v484
        %v565 = vmul.f32 %v506, %v485
        %v566 = vmul.f32 %v510, %v486
        %v567 = vmul.f32 %v514, %v487
        %v568 = vmul.f32 %v518, %v488
        %v569 = vmul.f32 %v522, %v489
        %v570 = vmul.f32 %v526, %v490
        %v571 = vmul.f32 %v530, %v491
        %v572 = vmul.f32 %v534, %v492
        %v573 = vmul.f32 %v538, %v493
        %v574 = vmul.f32 %v542, %v494
        %v575 = vmul.f32 %v546, %v495
        %v576 = vmul.f32 %v550, %v496
        %v577 = vmul.f32 %v554, %v497
        %v578 = vmul.f32 %v558, %v498
        %v579 = vmul.f32 %v562, %v499
        %v580 = vadd.f32 %v467, %v564
        %v581 = vadd.f32 %v468, %v565
        %v582 = vadd.f32 %v469, %v566
        %v583 = vadd.f32 %v470, %v567
        %v584 = vadd.f32 %v471, %v568
        %v585 = vadd.f32 %v472, %v569
        %v586 = vadd.f32 %v473, %v570
        %v587 = vadd.f32 %v474, %v571
        %v588 = vadd.f32 %v475, %v572
        %v589 = vadd.f32 %v476, %v573
        %v590 = vadd.f32 %v477, %v574
        %v591 = vadd.f32 %v478, %v575
        %v592 = vadd.f32 %v479, %v576
        %v593 = vadd.f32 %v480, %v577
        %v594 = vadd.f32 %v481, %v578
        %v595 = vadd.f32 %v482, %v579
        %s596 = scalar_lea.vmem %s275, 256 [#allocation3]
        %v597 = vld [vmem:[%s596] sm:$0xff]
        %v598 = vld [vmem:[%s596 + $0x8] sm:$0xff]
        %v599 = vld [vmem:[%s596 + $0x10] sm:$0xff]
        %v600 = vld [vmem:[%s596 + $0x18] sm:$0xff]
        %v601 = vld [vmem:[%s596 + $0x20] sm:$0xff]
        %v602 = vld [vmem:[%s596 + $0x28] sm:$0xff]
        %v603 = vld [vmem:[%s596 + $0x30] sm:$0xff]
        %v604 = vld [vmem:[%s596 + $0x38] sm:$0xff]
        %v605 = vld [vmem:[%s596 + $0x40] sm:$0xff]
        %v606 = vld [vmem:[%s596 + $0x48] sm:$0xff]
        %v607 = vld [vmem:[%s596 + $0x50] sm:$0xff]
        %v608 = vld [vmem:[%s596 + $0x58] sm:$0xff]
        %v609 = vld [vmem:[%s596 + $0x60] sm:$0xff]
        %v610 = vld [vmem:[%s596 + $0x68] sm:$0xff]
        %v611 = vld [vmem:[%s596 + $0x70] sm:$0xff]
        %v612 = vld [vmem:[%s596 + $0x78] sm:$0xff]
        %613 = vset.pattern.permute.xlu0 2
        %614 = vperm.xlu0 %613, %v355
        %v615 = vpop.permute.xlu0 %614
        %617 = vset.pattern.permute.xlu0 2
        %618 = vperm.xlu0 %617, %v356
        %v619 = vpop.permute.xlu0 %618
        %621 = vset.pattern.permute.xlu0 2
        %622 = vperm.xlu0 %621, %v357
        %v623 = vpop.permute.xlu0 %622
        %625 = vset.pattern.permute.xlu0 2
        %626 = vperm.xlu0 %625, %v358
        %v627 = vpop.permute.xlu0 %626
        %629 = vset.pattern.permute.xlu0 2
        %630 = vperm.xlu0 %629, %v359
        %v631 = vpop.permute.xlu0 %630
        %633 = vset.pattern.permute.xlu0 2
        %634 = vperm.xlu0 %633, %v360
        %v635 = vpop.permute.xlu0 %634
        %637 = vset.pattern.permute.xlu0 2
        %638 = vperm.xlu0 %637, %v361
        %v639 = vpop.permute.xlu0 %638
        %641 = vset.pattern.permute.xlu0 2
        %642 = vperm.xlu0 %641, %v362
        %v643 = vpop.permute.xlu0 %642
        %645 = vset.pattern.permute.xlu0 2
        %646 = vperm.xlu0 %645, %v363
        %v647 = vpop.permute.xlu0 %646
        %649 = vset.pattern.permute.xlu0 2
        %650 = vperm.xlu0 %649, %v364
        %v651 = vpop.permute.xlu0 %650
        %653 = vset.pattern.permute.xlu0 2
        %654 = vperm.xlu0 %653, %v365
        %v655 = vpop.permute.xlu0 %654
        %657 = vset.pattern.permute.xlu0 2
        %658 = vperm.xlu0 %657, %v366
        %v659 = vpop.permute.xlu0 %658
        %661 = vset.pattern.permute.xlu0 2
        %662 = vperm.xlu0 %661, %v367
        %v663 = vpop.permute.xlu0 %662
        %665 = vset.pattern.permute.xlu0 2
        %666 = vperm.xlu0 %665, %v368
        %v667 = vpop.permute.xlu0 %666
        %669 = vset.pattern.permute.xlu0 2
        %670 = vperm.xlu0 %669, %v369
        %v671 = vpop.permute.xlu0 %670
        %673 = vset.pattern.permute.xlu0 2
        %674 = vperm.xlu0 %673, %v370
        %v675 = vpop.permute.xlu0 %674
        %v677 = vmul.f32 %v615, %v597
        %v678 = vmul.f32 %v619, %v598
        %v679 = vmul.f32 %v623, %v599
        %v680 = vmul.f32 %v627, %v600
        %v681 = vmul.f32 %v631, %v601
        %v682 = vmul.f32 %v635, %v602
        %v683 = vmul.f32 %v639, %v603
        %v684 = vmul.f32 %v643, %v604
        %v685 = vmul.f32 %v647, %v605
        %v686 = vmul.f32 %v651, %v606
        %v687 = vmul.f32 %v655, %v607
        %v688 = vmul.f32 %v659, %v608
        %v689 = vmul.f32 %v663, %v609
        %v690 = vmul.f32 %v667, %v610
        %v691 = vmul.f32 %v671, %v611
        %v692 = vmul.f32 %v675, %v612
        %v693 = vadd.f32 %v580, %v677
        %v694 = vadd.f32 %v581, %v678
        %v695 = vadd.f32 %v582, %v679
        %v696 = vadd.f32 %v583, %v680
        %v697 = vadd.f32 %v584, %v681
        %v698 = vadd.f32 %v585, %v682
        %v699 = vadd.f32 %v586, %v683
        %v700 = vadd.f32 %v587, %v684
        %v701 = vadd.f32 %v588, %v685
        %v702 = vadd.f32 %v589, %v686
        %v703 = vadd.f32 %v590, %v687
        %v704 = vadd.f32 %v591, %v688
        %v705 = vadd.f32 %v592, %v689
        %v706 = vadd.f32 %v593, %v690
        %v707 = vadd.f32 %v594, %v691
        %v708 = vadd.f32 %v595, %v692
        %s709 = scalar_lea.vmem %s275, 384 [#allocation3]
        %v710 = vld [vmem:[%s709] sm:$0xff]
        %v711 = vld [vmem:[%s709 + $0x8] sm:$0xff]
        %v712 = vld [vmem:[%s709 + $0x10] sm:$0xff]
        %v713 = vld [vmem:[%s709 + $0x18] sm:$0xff]
        %v714 = vld [vmem:[%s709 + $0x20] sm:$0xff]
        %v715 = vld [vmem:[%s709 + $0x28] sm:$0xff]
        %v716 = vld [vmem:[%s709 + $0x30] sm:$0xff]
        %v717 = vld [vmem:[%s709 + $0x38] sm:$0xff]
        %v718 = vld [vmem:[%s709 + $0x40] sm:$0xff]
        %v719 = vld [vmem:[%s709 + $0x48] sm:$0xff]
        %v720 = vld [vmem:[%s709 + $0x50] sm:$0xff]
        %v721 = vld [vmem:[%s709 + $0x58] sm:$0xff]
        %v722 = vld [vmem:[%s709 + $0x60] sm:$0xff]
        %v723 = vld [vmem:[%s709 + $0x68] sm:$0xff]
        %v724 = vld [vmem:[%s709 + $0x70] sm:$0xff]
        %v725 = vld [vmem:[%s709 + $0x78] sm:$0xff]
        %726 = vset.pattern.permute.xlu0 3
        %727 = vperm.xlu0 %726, %v355
        %v728 = vpop.permute.xlu0 %727
        %730 = vset.pattern.permute.xlu0 3
        %731 = vperm.xlu0 %730, %v356
        %v732 = vpop.permute.xlu0 %731
        %734 = vset.pattern.permute.xlu0 3
        %735 = vperm.xlu0 %734, %v357
        %v736 = vpop.permute.xlu0 %735
        %738 = vset.pattern.permute.xlu0 3
        %739 = vperm.xlu0 %738, %v358
        %v740 = vpop.permute.xlu0 %739
        %742 = vset.pattern.permute.xlu0 3
        %743 = vperm.xlu0 %742, %v359
        %v744 = vpop.permute.xlu0 %743
        %746 = vset.pattern.permute.xlu0 3
        %747 = vperm.xlu0 %746, %v360
        %v748 = vpop.permute.xlu0 %747
        %750 = vset.pattern.permute.xlu0 3
        %751 = vperm.xlu0 %750, %v361
        %v752 = vpop.permute.xlu0 %751
        %754 = vset.pattern.permute.xlu0 3
        %755 = vperm.xlu0 %754, %v362
        %v756 = vpop.permute.xlu0 %755
        %758 = vset.pattern.permute.xlu0 3
        %759 = vperm.xlu0 %758, %v363
        %v760 = vpop.permute.xlu0 %759
        %762 = vset.pattern.permute.xlu0 3
        %763 = vperm.xlu0 %762, %v364
        %v764 = vpop.permute.xlu0 %763
        %766 = vset.pattern.permute.xlu0 3
        %767 = vperm.xlu0 %766, %v365
        %v768 = vpop.permute.xlu0 %767
        %770 = vset.pattern.permute.xlu0 3
        %771 = vperm.xlu0 %770, %v366
        %v772 = vpop.permute.xlu0 %771
        %774 = vset.pattern.permute.xlu0 3
        %775 = vperm.xlu0 %774, %v367
        %v776 = vpop.permute.xlu0 %775
        %778 = vset.pattern.permute.xlu0 3
        %779 = vperm.xlu0 %778, %v368
        %v780 = vpop.permute.xlu0 %779
        %782 = vset.pattern.permute.xlu0 3
        %783 = vperm.xlu0 %782, %v369
        %v784 = vpop.permute.xlu0 %783
        %786 = vset.pattern.permute.xlu0 3
        %787 = vperm.xlu0 %786, %v370
        %v788 = vpop.permute.xlu0 %787
        %v790 = vmul.f32 %v728, %v710
        %v791 = vmul.f32 %v732, %v711
        %v792 = vmul.f32 %v736, %v712
        %v793 = vmul.f32 %v740, %v713
        %v794 = vmul.f32 %v744, %v714
        %v795 = vmul.f32 %v748, %v715
        %v796 = vmul.f32 %v752, %v716
        %v797 = vmul.f32 %v756, %v717
        %v798 = vmul.f32 %v760, %v718
        %v799 = vmul.f32 %v764, %v719
        %v800 = vmul.f32 %v768, %v720
        %v801 = vmul.f32 %v772, %v721
        %v802 = vmul.f32 %v776, %v722
        %v803 = vmul.f32 %v780, %v723
        %v804 = vmul.f32 %v784, %v724
        %v805 = vmul.f32 %v788, %v725
        %v806 = vadd.f32 %v693, %v790
        %v807 = vadd.f32 %v694, %v791
        %v808 = vadd.f32 %v695, %v792
        %v809 = vadd.f32 %v696, %v793
        %v810 = vadd.f32 %v697, %v794
        %v811 = vadd.f32 %v698, %v795
        %v812 = vadd.f32 %v699, %v796
        %v813 = vadd.f32 %v700, %v797
        %v814 = vadd.f32 %v701, %v798
        %v815 = vadd.f32 %v702, %v799
        %v816 = vadd.f32 %v703, %v800
        %v817 = vadd.f32 %v704, %v801
        %v818 = vadd.f32 %v705, %v802
        %v819 = vadd.f32 %v706, %v803
        %v820 = vadd.f32 %v707, %v804
        %v821 = vadd.f32 %v708, %v805
        %s822 = scalar_lea.vmem %s275, 512 [#allocation3]
        %v823 = vld [vmem:[%s822] sm:$0xff]
        %v824 = vld [vmem:[%s822 + $0x8] sm:$0xff]
        %v825 = vld [vmem:[%s822 + $0x10] sm:$0xff]
        %v826 = vld [vmem:[%s822 + $0x18] sm:$0xff]
        %v827 = vld [vmem:[%s822 + $0x20] sm:$0xff]
        %v828 = vld [vmem:[%s822 + $0x28] sm:$0xff]
        %v829 = vld [vmem:[%s822 + $0x30] sm:$0xff]
        %v830 = vld [vmem:[%s822 + $0x38] sm:$0xff]
        %v831 = vld [vmem:[%s822 + $0x40] sm:$0xff]
        %v832 = vld [vmem:[%s822 + $0x48] sm:$0xff]
        %v833 = vld [vmem:[%s822 + $0x50] sm:$0xff]
        %v834 = vld [vmem:[%s822 + $0x58] sm:$0xff]
        %v835 = vld [vmem:[%s822 + $0x60] sm:$0xff]
        %v836 = vld [vmem:[%s822 + $0x68] sm:$0xff]
        %v837 = vld [vmem:[%s822 + $0x70] sm:$0xff]
        %v838 = vld [vmem:[%s822 + $0x78] sm:$0xff]
        %839 = vset.pattern.permute.xlu0 4
        %840 = vperm.xlu0 %839, %v355
        %v841 = vpop.permute.xlu0 %840
        %843 = vset.pattern.permute.xlu0 4
        %844 = vperm.xlu0 %843, %v356
        %v845 = vpop.permute.xlu0 %844
        %847 = vset.pattern.permute.xlu0 4
        %848 = vperm.xlu0 %847, %v357
        %v849 = vpop.permute.xlu0 %848
        %851 = vset.pattern.permute.xlu0 4
        %852 = vperm.xlu0 %851, %v358
        %v853 = vpop.permute.xlu0 %852
        %855 = vset.pattern.permute.xlu0 4
        %856 = vperm.xlu0 %855, %v359
        %v857 = vpop.permute.xlu0 %856
        %859 = vset.pattern.permute.xlu0 4
        %860 = vperm.xlu0 %859, %v360
        %v861 = vpop.permute.xlu0 %860
        %863 = vset.pattern.permute.xlu0 4
        %864 = vperm.xlu0 %863, %v361
        %v865 = vpop.permute.xlu0 %864
        %867 = vset.pattern.permute.xlu0 4
        %868 = vperm.xlu0 %867, %v362
        %v869 = vpop.permute.xlu0 %868
        %871 = vset.pattern.permute.xlu0 4
        %872 = vperm.xlu0 %871, %v363
        %v873 = vpop.permute.xlu0 %872
        %875 = vset.pattern.permute.xlu0 4
        %876 = vperm.xlu0 %875, %v364
        %v877 = vpop.permute.xlu0 %876
        %879 = vset.pattern.permute.xlu0 4
        %880 = vperm.xlu0 %879, %v365
        %v881 = vpop.permute.xlu0 %880
        %883 = vset.pattern.permute.xlu0 4
        %884 = vperm.xlu0 %883, %v366
        %v885 = vpop.permute.xlu0 %884
        %887 = vset.pattern.permute.xlu0 4
        %888 = vperm.xlu0 %887, %v367
        %v889 = vpop.permute.xlu0 %888
        %891 = vset.pattern.permute.xlu0 4
        %892 = vperm.xlu0 %891, %v368
        %v893 = vpop.permute.xlu0 %892
        %895 = vset.pattern.permute.xlu0 4
        %896 = vperm.xlu0 %895, %v369
        %v897 = vpop.permute.xlu0 %896
        %899 = vset.pattern.permute.xlu0 4
        %900 = vperm.xlu0 %899, %v370
        %v901 = vpop.permute.xlu0 %900
        %v903 = vmul.f32 %v841, %v823
        %v904 = vmul.f32 %v845, %v824
        %v905 = vmul.f32 %v849, %v825
        %v906 = vmul.f32 %v853, %v826
        %v907 = vmul.f32 %v857, %v827
        %v908 = vmul.f32 %v861, %v828
        %v909 = vmul.f32 %v865, %v829
        %v910 = vmul.f32 %v869, %v830
        %v911 = vmul.f32 %v873, %v831
        %v912 = vmul.f32 %v877, %v832
        %v913 = vmul.f32 %v881, %v833
        %v914 = vmul.f32 %v885, %v834
        %v915 = vmul.f32 %v889, %v835
        %v916 = vmul.f32 %v893, %v836
        %v917 = vmul.f32 %v897, %v837
        %v918 = vmul.f32 %v901, %v838
        %v919 = vadd.f32 %v806, %v903
        %v920 = vadd.f32 %v807, %v904
        %v921 = vadd.f32 %v808, %v905
        %v922 = vadd.f32 %v809, %v906
        %v923 = vadd.f32 %v810, %v907
        %v924 = vadd.f32 %v811, %v908
        %v925 = vadd.f32 %v812, %v909
        %v926 = vadd.f32 %v813, %v910
        %v927 = vadd.f32 %v814, %v911
        %v928 = vadd.f32 %v815, %v912
        %v929 = vadd.f32 %v816, %v913
        %v930 = vadd.f32 %v817, %v914
        %v931 = vadd.f32 %v818, %v915
        %v932 = vadd.f32 %v819, %v916
        %v933 = vadd.f32 %v820, %v917
        %v934 = vadd.f32 %v821, %v918
        %s935 = scalar_lea.vmem %s275, 640 [#allocation3]
        %v936 = vld [vmem:[%s935] sm:$0xff]
        %v937 = vld [vmem:[%s935 + $0x8] sm:$0xff]
        %v938 = vld [vmem:[%s935 + $0x10] sm:$0xff]
        %v939 = vld [vmem:[%s935 + $0x18] sm:$0xff]
        %v940 = vld [vmem:[%s935 + $0x20] sm:$0xff]
        %v941 = vld [vmem:[%s935 + $0x28] sm:$0xff]
        %v942 = vld [vmem:[%s935 + $0x30] sm:$0xff]
        %v943 = vld [vmem:[%s935 + $0x38] sm:$0xff]
        %v944 = vld [vmem:[%s935 + $0x40] sm:$0xff]
        %v945 = vld [vmem:[%s935 + $0x48] sm:$0xff]
        %v946 = vld [vmem:[%s935 + $0x50] sm:$0xff]
        %v947 = vld [vmem:[%s935 + $0x58] sm:$0xff]
        %v948 = vld [vmem:[%s935 + $0x60] sm:$0xff]
        %v949 = vld [vmem:[%s935 + $0x68] sm:$0xff]
        %v950 = vld [vmem:[%s935 + $0x70] sm:$0xff]
        %v951 = vld [vmem:[%s935 + $0x78] sm:$0xff]
        %952 = vset.pattern.permute.xlu0 5
        %953 = vperm.xlu0 %952, %v355
        %v954 = vpop.permute.xlu0 %953
        %956 = vset.pattern.permute.xlu0 5
        %957 = vperm.xlu0 %956, %v356
        %v958 = vpop.permute.xlu0 %957
        %960 = vset.pattern.permute.xlu0 5
        %961 = vperm.xlu0 %960, %v357
        %v962 = vpop.permute.xlu0 %961
        %964 = vset.pattern.permute.xlu0 5
        %965 = vperm.xlu0 %964, %v358
        %v966 = vpop.permute.xlu0 %965
        %968 = vset.pattern.permute.xlu0 5
        %969 = vperm.xlu0 %968, %v359
        %v970 = vpop.permute.xlu0 %969
        %972 = vset.pattern.permute.xlu0 5
        %973 = vperm.xlu0 %972, %v360
        %v974 = vpop.permute.xlu0 %973
        %976 = vset.pattern.permute.xlu0 5
        %977 = vperm.xlu0 %976, %v361
        %v978 = vpop.permute.xlu0 %977
        %980 = vset.pattern.permute.xlu0 5
        %981 = vperm.xlu0 %980, %v362
        %v982 = vpop.permute.xlu0 %981
        %984 = vset.pattern.permute.xlu0 5
        %985 = vperm.xlu0 %984, %v363
        %v986 = vpop.permute.xlu0 %985
        %988 = vset.pattern.permute.xlu0 5
        %989 = vperm.xlu0 %988, %v364
        %v990 = vpop.permute.xlu0 %989
        %992 = vset.pattern.permute.xlu0 5
        %993 = vperm.xlu0 %992, %v365
        %v994 = vpop.permute.xlu0 %993
        %996 = vset.pattern.permute.xlu0 5
        %997 = vperm.xlu0 %996, %v366
        %v998 = vpop.permute.xlu0 %997
        %1000 = vset.pattern.permute.xlu0 5
        %1001 = vperm.xlu0 %1000, %v367
        %v1002 = vpop.permute.xlu0 %1001
        %1004 = vset.pattern.permute.xlu0 5
        %1005 = vperm.xlu0 %1004, %v368
        %v1006 = vpop.permute.xlu0 %1005
        %1008 = vset.pattern.permute.xlu0 5
        %1009 = vperm.xlu0 %1008, %v369
        %v1010 = vpop.permute.xlu0 %1009
        %1012 = vset.pattern.permute.xlu0 5
        %1013 = vperm.xlu0 %1012, %v370
        %v1014 = vpop.permute.xlu0 %1013
        %v1016 = vmul.f32 %v954, %v936
        %v1017 = vmul.f32 %v958, %v937
        %v1018 = vmul.f32 %v962, %v938
        %v1019 = vmul.f32 %v966, %v939
        %v1020 = vmul.f32 %v970, %v940
        %v1021 = vmul.f32 %v974, %v941
        %v1022 = vmul.f32 %v978, %v942
        %v1023 = vmul.f32 %v982, %v943
        %v1024 = vmul.f32 %v986, %v944
        %v1025 = vmul.f32 %v990, %v945
        %v1026 = vmul.f32 %v994, %v946
        %v1027 = vmul.f32 %v998, %v947
        %v1028 = vmul.f32 %v1002, %v948
        %v1029 = vmul.f32 %v1006, %v949
        %v1030 = vmul.f32 %v1010, %v950
        %v1031 = vmul.f32 %v1014, %v951
        %v1032 = vadd.f32 %v919, %v1016
        %v1033 = vadd.f32 %v920, %v1017
        %v1034 = vadd.f32 %v921, %v1018
        %v1035 = vadd.f32 %v922, %v1019
        %v1036 = vadd.f32 %v923, %v1020
        %v1037 = vadd.f32 %v924, %v1021
        %v1038 = vadd.f32 %v925, %v1022
        %v1039 = vadd.f32 %v926, %v1023
        %v1040 = vadd.f32 %v927, %v1024
        %v1041 = vadd.f32 %v928, %v1025
        %v1042 = vadd.f32 %v929, %v1026
        %v1043 = vadd.f32 %v930, %v1027
        %v1044 = vadd.f32 %v931, %v1028
        %v1045 = vadd.f32 %v932, %v1029
        %v1046 = vadd.f32 %v933, %v1030
        %v1047 = vadd.f32 %v934, %v1031
        %vm1048 = vcmp.lt.f32.partialorder %v1032, 1e-05
        %vm1049 = vcmp.lt.f32.partialorder %v1033, 1e-05
        %vm1050 = vcmp.lt.f32.partialorder %v1034, 1e-05
        %vm1051 = vcmp.lt.f32.partialorder %v1035, 1e-05
        %vm1052 = vcmp.lt.f32.partialorder %v1036, 1e-05
        %vm1053 = vcmp.lt.f32.partialorder %v1037, 1e-05
        %vm1054 = vcmp.lt.f32.partialorder %v1038, 1e-05
        %vm1055 = vcmp.lt.f32.partialorder %v1039, 1e-05
        %vm1056 = vcmp.lt.f32.partialorder %v1040, 1e-05
        %vm1057 = vcmp.lt.f32.partialorder %v1041, 1e-05
        %vm1058 = vcmp.lt.f32.partialorder %v1042, 1e-05
        %vm1059 = vcmp.lt.f32.partialorder %v1043, 1e-05
        %vm1060 = vcmp.lt.f32.partialorder %v1044, 1e-05
        %vm1061 = vcmp.lt.f32.partialorder %v1045, 1e-05
        %vm1062 = vcmp.lt.f32.partialorder %v1046, 1e-05
        %vm1063 = vcmp.lt.f32.partialorder %v1047, 1e-05
        %v1064 = vsel %vm1048, 0.0, %v1032
        %v1065 = vsel %vm1049, 0.0, %v1033
        %v1066 = vsel %vm1050, 0.0, %v1034
        %v1067 = vsel %vm1051, 0.0, %v1035
        %v1068 = vsel %vm1052, 0.0, %v1036
        %v1069 = vsel %vm1053, 0.0, %v1037
        %v1070 = vsel %vm1054, 0.0, %v1038
        %v1071 = vsel %vm1055, 0.0, %v1039
        %v1072 = vsel %vm1056, 0.0, %v1040
        %v1073 = vsel %vm1057, 0.0, %v1041
        %v1074 = vsel %vm1058, 0.0, %v1042
        %v1075 = vsel %vm1059, 0.0, %v1043
        %v1076 = vsel %vm1060, 0.0, %v1044
        %v1077 = vsel %vm1061, 0.0, %v1045
        %v1078 = vsel %vm1062, 0.0, %v1046
        %v1079 = vsel %vm1063, 0.0, %v1047
        %v1080 = vld [vmem:[#allocation2] sm:$0xff]
        %v1081 = vld [vmem:[#allocation2 + $0x8] sm:$0xff]
        %v1082 = vld [vmem:[#allocation2 + $0x10] sm:$0xff]
        %v1083 = vld [vmem:[#allocation2 + $0x18] sm:$0xff]
        %v1084 = vld [vmem:[#allocation2 + $0x20] sm:$0xff]
        %v1085 = vld [vmem:[#allocation2 + $0x28] sm:$0xff]
        %v1086 = vld [vmem:[#allocation2 + $0x30] sm:$0xff]
        %v1087 = vld [vmem:[#allocation2 + $0x38] sm:$0xff]
        %v1088 = vld [vmem:[#allocation2 + $0x40] sm:$0xff]
        %v1089 = vld [vmem:[#allocation2 + $0x48] sm:$0xff]
        %v1090 = vld [vmem:[#allocation2 + $0x50] sm:$0xff]
        %v1091 = vld [vmem:[#allocation2 + $0x58] sm:$0xff]
        %v1092 = vld [vmem:[#allocation2 + $0x60] sm:$0xff]
        %v1093 = vld [vmem:[#allocation2 + $0x68] sm:$0xff]
        %v1094 = vld [vmem:[#allocation2 + $0x70] sm:$0xff]
        %v1095 = vld [vmem:[#allocation2 + $0x78] sm:$0xff]
        %v1096 = vpack.c.bf16 %v1065, %v1064
        %v1097 = vpack.c.bf16 %v1067, %v1066
        %v1098 = vpack.c.bf16 %v1069, %v1068
        %v1099 = vpack.c.bf16 %v1071, %v1070
        %v1100 = vpack.c.bf16 %v1073, %v1072
        %v1101 = vpack.c.bf16 %v1075, %v1074
        %v1102 = vpack.c.bf16 %v1077, %v1076
        %v1103 = vpack.c.bf16 %v1079, %v1078
        %v1104 = vld [vmem:[%s284] sm:$0xff]
        %v1105 = vld [vmem:[%s284 + $0x8] sm:$0xff]
        %v1106 = vld [vmem:[%s284 + $0x10] sm:$0xff]
        %v1107 = vld [vmem:[%s284 + $0x18] sm:$0xff]
        %v1108 = vld [vmem:[%s284 + $0x20] sm:$0xff]
        %v1109 = vld [vmem:[%s284 + $0x28] sm:$0xff]
        %v1110 = vld [vmem:[%s284 + $0x30] sm:$0xff]
        %v1111 = vld [vmem:[%s284 + $0x38] sm:$0xff]
        %v1112 = vld [vmem:[%s284 + $0x40] sm:$0xff]
        %v1113 = vld [vmem:[%s284 + $0x48] sm:$0xff]
        %v1114 = vld [vmem:[%s284 + $0x50] sm:$0xff]
        %v1115 = vld [vmem:[%s284 + $0x58] sm:$0xff]
        %v1116 = vld [vmem:[%s284 + $0x60] sm:$0xff]
        %v1117 = vld [vmem:[%s284 + $0x68] sm:$0xff]
        %v1118 = vld [vmem:[%s284 + $0x70] sm:$0xff]
        %v1119 = vld [vmem:[%s284 + $0x78] sm:$0xff]
        %v1120 = vpack.c.bf16 %v1105, %v1104
        %v1121 = vpack.c.bf16 %v1107, %v1106
        %v1122 = vpack.c.bf16 %v1109, %v1108
        %v1123 = vpack.c.bf16 %v1111, %v1110
        %v1124 = vpack.c.bf16 %v1113, %v1112
        %v1125 = vpack.c.bf16 %v1115, %v1114
        %v1126 = vpack.c.bf16 %v1117, %v1116
        %v1127 = vpack.c.bf16 %v1119, %v1118
        %1128 = vmatprep.subr.bf16.mxu0 0
        %1129 = vmatpush1.bf16.msra.mxu0 %v1120
        %1130 = vmatprep.subr.bf16.mxu0 0
        %1131 = vmatpush1.bf16.msra.mxu0 %v1121
        %1132 = vmatprep.subr.bf16.mxu0 0
        %1133 = vmatpush1.bf16.msra.mxu0 %v1122
        %1134 = vmatprep.subr.bf16.mxu0 0
        %1135 = vmatpush1.bf16.msra.mxu0 %v1123
        %1136 = vmatprep.subr.bf16.mxu0 0
        %1137 = vmatpush1.bf16.msra.mxu0 %v1124
        %1138 = vmatprep.subr.bf16.mxu0 0
        %1139 = vmatpush1.bf16.msra.mxu0 %v1125
        %1140 = vmatprep.subr.bf16.mxu0 0
        %1141 = vmatpush1.bf16.msra.mxu0 %v1126
        %1142 = vmatprep.subr.bf16.mxu0 0
        %1143 = vmatpush1.bf16.msra.mxu0 %v1127
        %1144 = vmatprep.subr.bf16.mxu0 0
        %1145 = vmatpush1.bf16.msra.mxu0 0
        %1146 = vmatprep.subr.bf16.mxu0 0
        %1147 = vmatpush1.bf16.msra.mxu0 0
        %1148 = vmatprep.subr.bf16.mxu0 0
        %1149 = vmatpush1.bf16.msra.mxu0 0
        %1150 = vmatprep.subr.bf16.mxu0 0
        %1151 = vmatpush1.bf16.msra.mxu0 0
        %1152 = vmatprep.subr.bf16.mxu0 0
        %1153 = vmatpush1.bf16.msra.mxu0 0
        %1154 = vmatprep.subr.bf16.mxu0 0
        %1155 = vmatpush1.bf16.msra.mxu0 0
        %1156 = vmatprep.subr.bf16.mxu0 0
        %1157 = vmatpush1.bf16.msra.mxu0 0
        %1158 = vmatprep.subr.bf16.mxu0 0
        %1159 = vmatpush1.bf16.msra.mxu0 0
        %1160 = vmatprep.mubr.bf16.mxu0 0
        %1161 = vmatmul.mubr.bf16.gmra.mrb[0].mxu0 %v1096
        %v1162 = vpop.f32.mrb[0].mxu0
        %v1163 = vadd.f32 0.0, %v1162
        %v1164 = vpop.f32.mrb[0].mxu0
        %v1165 = vpop.f32.mrb[0].mxu0
        %v1166 = vadd.f32 0.0, %v1165
        %v1167 = vpop.f32.mrb[0].mxu0
        %1168 = vmatprep.mubr.bf16.mxu0 0
        %1169 = vmatmul.mubr.bf16.gmra.mrb[0].mxu0 %v1097
        %v1170 = vpop.f32.mrb[0].mxu0
        %v1171 = vadd.f32 0.0, %v1170
        %v1172 = vpop.f32.mrb[0].mxu0
        %v1173 = vpop.f32.mrb[0].mxu0
        %v1174 = vadd.f32 0.0, %v1173
        %v1175 = vpop.f32.mrb[0].mxu0
        %1176 = vmatprep.mubr.bf16.mxu0 0
        %1177 = vmatmul.mubr.bf16.gmra.mrb[0].mxu0 %v1098
        %v1178 = vpop.f32.mrb[0].mxu0
        %v1179 = vadd.f32 0.0, %v1178
        %v1180 = vpop.f32.mrb[0].mxu0
        %v1181 = vpop.f32.mrb[0].mxu0
        %v1182 = vadd.f32 0.0, %v1181
        %v1183 = vpop.f32.mrb[0].mxu0
        %1184 = vmatprep.mubr.bf16.mxu0 0
        %1185 = vmatmul.mubr.bf16.gmra.mrb[0].mxu0 %v1099
        %v1186 = vpop.f32.mrb[0].mxu0
        %v1187 = vadd.f32 0.0, %v1186
        %v1188 = vpop.f32.mrb[0].mxu0
        %v1189 = vpop.f32.mrb[0].mxu0
        %v1190 = vadd.f32 0.0, %v1189
        %v1191 = vpop.f32.mrb[0].mxu0
        %1192 = vmatprep.mubr.bf16.mxu0 0
        %1193 = vmatmul.mubr.bf16.gmra.mrb[0].mxu0 %v1100
        %v1194 = vpop.f32.mrb[0].mxu0
        %v1195 = vadd.f32 0.0, %v1194
        %v1196 = vpop.f32.mrb[0].mxu0
        %v1197 = vpop.f32.mrb[0].mxu0
        %v1198 = vadd.f32 0.0, %v1197
        %v1199 = vpop.f32.mrb[0].mxu0
        %1200 = vmatprep.mubr.bf16.mxu0 0
        %1201 = vmatmul.mubr.bf16.gmra.mrb[0].mxu0 %v1101
        %v1202 = vpop.f32.mrb[0].mxu0
        %v1203 = vadd.f32 0.0, %v1202
        %v1204 = vpop.f32.mrb[0].mxu0
        %v1205 = vpop.f32.mrb[0].mxu0
        %v1206 = vadd.f32 0.0, %v1205
        %v1207 = vpop.f32.mrb[0].mxu0
        %1208 = vmatprep.mubr.bf16.mxu0 0
        %1209 = vmatmul.mubr.bf16.gmra.mrb[0].mxu0 %v1102
        %v1210 = vpop.f32.mrb[0].mxu0
        %v1211 = vadd.f32 0.0, %v1210
        %v1212 = vpop.f32.mrb[0].mxu0
        %v1213 = vpop.f32.mrb[0].mxu0
        %v1214 = vadd.f32 0.0, %v1213
        %v1215 = vpop.f32.mrb[0].mxu0
        %1216 = vmatprep.mubr.bf16.mxu0 0
        %1217 = vmatmul.mubr.bf16.gmra.mrb[0].mxu0 %v1103
        %v1218 = vpop.f32.mrb[0].mxu0
        %v1219 = vadd.f32 0.0, %v1218
        %v1220 = vpop.f32.mrb[0].mxu0
        %v1221 = vpop.f32.mrb[0].mxu0
        %v1222 = vadd.f32 0.0, %v1221
        %v1223 = vpop.f32.mrb[0].mxu0
        %1224 = vdwg.mxu0
        %v1225 = vadd.f32 %v1080, %v1163
        %v1226 = vadd.f32 %v1081, %v1166
        %v1227 = vadd.f32 %v1082, %v1171
        %v1228 = vadd.f32 %v1083, %v1174
        %v1229 = vadd.f32 %v1084, %v1179
        %v1230 = vadd.f32 %v1085, %v1182
        %v1231 = vadd.f32 %v1086, %v1187
        %v1232 = vadd.f32 %v1087, %v1190
        %v1233 = vadd.f32 %v1088, %v1195
        %v1234 = vadd.f32 %v1089, %v1198
        %v1235 = vadd.f32 %v1090, %v1203
        %v1236 = vadd.f32 %v1091, %v1206
        %v1237 = vadd.f32 %v1092, %v1211
        %v1238 = vadd.f32 %v1093, %v1214
        %v1239 = vadd.f32 %v1094, %v1219
        %v1240 = vadd.f32 %v1095, %v1222
        %1241 = vst [vmem:[#allocation2] sm:$0xff] %v1225
        %1242 = vst [vmem:[#allocation2 + $0x8] sm:$0xff] %v1226
        %1243 = vst [vmem:[#allocation2 + $0x10] sm:$0xff] %v1227
        %1244 = vst [vmem:[#allocation2 + $0x18] sm:$0xff] %v1228
        %1245 = vst [vmem:[#allocation2 + $0x20] sm:$0xff] %v1229
        %1246 = vst [vmem:[#allocation2 + $0x28] sm:$0xff] %v1230
        %1247 = vst [vmem:[#allocation2 + $0x30] sm:$0xff] %v1231
        %1248 = vst [vmem:[#allocation2 + $0x38] sm:$0xff] %v1232
        %1249 = vst [vmem:[#allocation2 + $0x40] sm:$0xff] %v1233
        %1250 = vst [vmem:[#allocation2 + $0x48] sm:$0xff] %v1234
        %1251 = vst [vmem:[#allocation2 + $0x50] sm:$0xff] %v1235
        %1252 = vst [vmem:[#allocation2 + $0x58] sm:$0xff] %v1236
        %1253 = vst [vmem:[#allocation2 + $0x60] sm:$0xff] %v1237
        %1254 = vst [vmem:[#allocation2 + $0x68] sm:$0xff] %v1238
        %1255 = vst [vmem:[#allocation2 + $0x70] sm:$0xff] %v1239
        %1256 = vst [vmem:[#allocation2 + $0x78] sm:$0xff] %v1240
        %p1257 = scmp.eq.s32.totalorder %s33, 1
        // Predicated region
        $region45: #{tpu_custom_call.1} parent=31 // pred_check
          %p1258 = pneg %p1257
        $region46: #{tpu_custom_call.1} parent=31 // pred_check_branch
          %1260 = sbr.rel (%p1258) target = $region48
        $region47: #{tpu_custom_call.1} parent=31 // pred_region
          %v1261 = vld [vmem:[#allocation2] sm:$0xff]
          %v1262 = vld [vmem:[#allocation2 + $0x8] sm:$0xff]
          %v1263 = vld [vmem:[#allocation2 + $0x10] sm:$0xff]
          %v1264 = vld [vmem:[#allocation2 + $0x18] sm:$0xff]
          %v1265 = vld [vmem:[#allocation2 + $0x20] sm:$0xff]
          %v1266 = vld [vmem:[#allocation2 + $0x28] sm:$0xff]
          %v1267 = vld [vmem:[#allocation2 + $0x30] sm:$0xff]
          %v1268 = vld [vmem:[#allocation2 + $0x38] sm:$0xff]
          %v1269 = vld [vmem:[#allocation2 + $0x40] sm:$0xff]
          %v1270 = vld [vmem:[#allocation2 + $0x48] sm:$0xff]
          %v1271 = vld [vmem:[#allocation2 + $0x50] sm:$0xff]
          %v1272 = vld [vmem:[#allocation2 + $0x58] sm:$0xff]
          %v1273 = vld [vmem:[#allocation2 + $0x60] sm:$0xff]
          %v1274 = vld [vmem:[#allocation2 + $0x68] sm:$0xff]
          %v1275 = vld [vmem:[#allocation2 + $0x70] sm:$0xff]
          %v1276 = vld [vmem:[#allocation2 + $0x78] sm:$0xff]
          %vm1277 = vcmp.gt.f32.partialorder %v1261, 0.0
          %vm1278 = vcmp.gt.f32.partialorder %v1262, 0.0
          %vm1279 = vcmp.gt.f32.partialorder %v1263, 0.0
          %vm1280 = vcmp.gt.f32.partialorder %v1264, 0.0
          %vm1281 = vcmp.gt.f32.partialorder %v1265, 0.0
          %vm1282 = vcmp.gt.f32.partialorder %v1266, 0.0
          %vm1283 = vcmp.gt.f32.partialorder %v1267, 0.0
          %vm1284 = vcmp.gt.f32.partialorder %v1268, 0.0
          %vm1285 = vcmp.gt.f32.partialorder %v1269, 0.0
          %vm1286 = vcmp.gt.f32.partialorder %v1270, 0.0
          %vm1287 = vcmp.gt.f32.partialorder %v1271, 0.0
          %vm1288 = vcmp.gt.f32.partialorder %v1272, 0.0
          %vm1289 = vcmp.gt.f32.partialorder %v1273, 0.0
          %vm1290 = vcmp.gt.f32.partialorder %v1274, 0.0
          %vm1291 = vcmp.gt.f32.partialorder %v1275, 0.0
          %vm1292 = vcmp.gt.f32.partialorder %v1276, 0.0
          %v1293 = vsel %vm1277, 1, 0
          %v1294 = vsel %vm1278, 1, 0
          %v1295 = vsel %vm1279, 1, 0
          %v1296 = vsel %vm1280, 1, 0
          %v1297 = vsel %vm1281, 1, 0
          %v1298 = vsel %vm1282, 1, 0
          %v1299 = vsel %vm1283, 1, 0
          %v1300 = vsel %vm1284, 1, 0
          %v1301 = vsel %vm1285, 1, 0
          %v1302 = vsel %vm1286, 1, 0
          %v1303 = vsel %vm1287, 1, 0
          %v1304 = vsel %vm1288, 1, 0
          %v1305 = vsel %vm1289, 1, 0
          %v1306 = vsel %vm1290, 1, 0
          %v1307 = vsel %vm1291, 1, 0
          %v1308 = vsel %vm1292, 1, 0
          %v1309 = vcvt.s32.f32 %v1293
          %v1310 = vcvt.s32.f32 %v1294
          %v1311 = vcvt.s32.f32 %v1295
          %v1312 = vcvt.s32.f32 %v1296
          %v1313 = vcvt.s32.f32 %v1297
          %v1314 = vcvt.s32.f32 %v1298
          %v1315 = vcvt.s32.f32 %v1299
          %v1316 = vcvt.s32.f32 %v1300
          %v1317 = vcvt.s32.f32 %v1301
          %v1318 = vcvt.s32.f32 %v1302
          %v1319 = vcvt.s32.f32 %v1303
          %v1320 = vcvt.s32.f32 %v1304
          %v1321 = vcvt.s32.f32 %v1305
          %v1322 = vcvt.s32.f32 %v1306
          %v1323 = vcvt.s32.f32 %v1307
          %v1324 = vcvt.s32.f32 %v1308
          %v1325 = vmul.f32 %v1261, %v1309
          %v1326 = vmul.f32 %v1262, %v1310
          %v1327 = vmul.f32 %v1263, %v1311
          %v1328 = vmul.f32 %v1264, %v1312
          %v1329 = vmul.f32 %v1265, %v1313
          %v1330 = vmul.f32 %v1266, %v1314
          %v1331 = vmul.f32 %v1267, %v1315
          %v1332 = vmul.f32 %v1268, %v1316
          %v1333 = vmul.f32 %v1269, %v1317
          %v1334 = vmul.f32 %v1270, %v1318
          %v1335 = vmul.f32 %v1271, %v1319
          %v1336 = vmul.f32 %v1272, %v1320
          %v1337 = vmul.f32 %v1273, %v1321
          %v1338 = vmul.f32 %v1274, %v1322
          %v1339 = vmul.f32 %v1275, %v1323
          %v1340 = vmul.f32 %v1276, %v1324
          %v1341 = vmul.f32 %v1309, 2.0
          %v1342 = vmul.f32 %v1310, 2.0
          %v1343 = vmul.f32 %v1311, 2.0
          %v1344 = vmul.f32 %v1312, 2.0
          %v1345 = vmul.f32 %v1313, 2.0
          %v1346 = vmul.f32 %v1314, 2.0
          %v1347 = vmul.f32 %v1315, 2.0
          %v1348 = vmul.f32 %v1316, 2.0
          %v1349 = vmul.f32 %v1317, 2.0
          %v1350 = vmul.f32 %v1318, 2.0
          %v1351 = vmul.f32 %v1319, 2.0
          %v1352 = vmul.f32 %v1320, 2.0
          %v1353 = vmul.f32 %v1321, 2.0
          %v1354 = vmul.f32 %v1322, 2.0
          %v1355 = vmul.f32 %v1323, 2.0
          %v1356 = vmul.f32 %v1324, 2.0
          %v1357 = vpack.c.bf16 %v1342, %v1341
          %v1358 = vpack.c.bf16 %v1344, %v1343
          %v1359 = vpack.c.bf16 %v1346, %v1345
          %v1360 = vpack.c.bf16 %v1348, %v1347
          %v1361 = vpack.c.bf16 %v1350, %v1349
          %v1362 = vpack.c.bf16 %v1352, %v1351
          %v1363 = vpack.c.bf16 %v1354, %v1353
          %v1364 = vpack.c.bf16 %v1356, %v1355
          %v1373 = vunpack.c.l.b16 %v1357
          %v1374 = vunpack.c.h.b16 %v1357
          %v1375 = vunpack.c.l.b16 %v1358
          %v1376 = vunpack.c.h.b16 %v1358
          %v1377 = vunpack.c.l.b16 %v1359
          %v1378 = vunpack.c.h.b16 %v1359
          %v1379 = vunpack.c.l.b16 %v1360
          %v1380 = vunpack.c.h.b16 %v1360
          %v1381 = vunpack.c.l.b16 %v1361
          %v1382 = vunpack.c.h.b16 %v1361
          %v1383 = vunpack.c.l.b16 %v1362
          %v1384 = vunpack.c.h.b16 %v1362
          %v1385 = vunpack.c.l.b16 %v1363
          %v1386 = vunpack.c.h.b16 %v1363
          %v1387 = vunpack.c.l.b16 %v1364
          %v1388 = vunpack.c.h.b16 %v1364
          %v1389 = vpack.c.b16 %v1373, %v1373
          %v1390 = vpack.c.b16 %v1374, %v1374
          %v1391 = vpack.c.b16 %v1375, %v1375
          %v1392 = vpack.c.b16 %v1376, %v1376
          %v1393 = vpack.c.b16 %v1377, %v1377
          %v1394 = vpack.c.b16 %v1378, %v1378
          %v1395 = vpack.c.b16 %v1379, %v1379
          %v1396 = vpack.c.b16 %v1380, %v1380
          %v1397 = vpack.c.b16 %v1381, %v1381
          %v1398 = vpack.c.b16 %v1382, %v1382
          %v1399 = vpack.c.b16 %v1383, %v1383
          %v1400 = vpack.c.b16 %v1384, %v1384
          %v1401 = vpack.c.b16 %v1385, %v1385
          %v1402 = vpack.c.b16 %v1386, %v1386
          %v1403 = vpack.c.b16 %v1387, %v1387
          %v1404 = vpack.c.b16 %v1388, %v1388
          %1421 = vst [vmem:[%s323] sm:$0xf] %v1389
          %1422 = vst [vmem:[%s323 + $0x4] sm:$0xf] %v1390
          %1423 = vst [vmem:[%s323 + $0x8] sm:$0xf] %v1391
          %1424 = vst [vmem:[%s323 + $0xc] sm:$0xf] %v1392
          %1425 = vst [vmem:[%s323 + $0x10] sm:$0xf] %v1393
          %1426 = vst [vmem:[%s323 + $0x14] sm:$0xf] %v1394
          %1427 = vst [vmem:[%s323 + $0x18] sm:$0xf] %v1395
          %1428 = vst [vmem:[%s323 + $0x1c] sm:$0xf] %v1396
          %1429 = vst [vmem:[%s323 + $0x20] sm:$0xf] %v1397
          %1430 = vst [vmem:[%s323 + $0x24] sm:$0xf] %v1398
          %1431 = vst [vmem:[%s323 + $0x28] sm:$0xf] %v1399
          %1432 = vst [vmem:[%s323 + $0x2c] sm:$0xf] %v1400
          %1433 = vst [vmem:[%s323 + $0x30] sm:$0xf] %v1401
          %1434 = vst [vmem:[%s323 + $0x34] sm:$0xf] %v1402
          %1435 = vst [vmem:[%s323 + $0x38] sm:$0xf] %v1403
          %1436 = vst [vmem:[%s323 + $0x3c] sm:$0xf] %v1404
          %1437 = vst [vmem:[%s316] sm:$0xff] %v1325
          %1438 = vst [vmem:[%s316 + $0x8] sm:$0xff] %v1326
          %1439 = vst [vmem:[%s316 + $0x10] sm:$0xff] %v1327
          %1440 = vst [vmem:[%s316 + $0x18] sm:$0xff] %v1328
          %1441 = vst [vmem:[%s316 + $0x20] sm:$0xff] %v1329
          %1442 = vst [vmem:[%s316 + $0x28] sm:$0xff] %v1330
          %1443 = vst [vmem:[%s316 + $0x30] sm:$0xff] %v1331
          %1444 = vst [vmem:[%s316 + $0x38] sm:$0xff] %v1332
          %1445 = vst [vmem:[%s316 + $0x40] sm:$0xff] %v1333
          %1446 = vst [vmem:[%s316 + $0x48] sm:$0xff] %v1334
          %1447 = vst [vmem:[%s316 + $0x50] sm:$0xff] %v1335
          %1448 = vst [vmem:[%s316 + $0x58] sm:$0xff] %v1336
          %1449 = vst [vmem:[%s316 + $0x60] sm:$0xff] %v1337
          %1450 = vst [vmem:[%s316 + $0x68] sm:$0xff] %v1338
          %1451 = vst [vmem:[%s316 + $0x70] sm:$0xff] %v1339
          %1452 = vst [vmem:[%s316 + $0x78] sm:$0xff] %v1340
        $region48: #{tpu_custom_call.1} parent=31 // pred_fallthru
          _
        %s1453 = sand.u32 %s128, 1
        %s1454 = scalar_lea.sflag [#allocation5], %s1453
        %s1455 = sand.u32 %s128, 1
        %s1456 = smul.addr %s1455, 128
        %s1457 = scalar_lea.vmem [#allocation8], %s1456
        %s1458 = sand.u32 %s154, 1
        %s1459 = scalar_lea.sflag [#allocation10], %s1458
        %s1460 = sand.u32 %s154, 1
        %s1461 = smul.addr %s1460, 64
        %s1462 = scalar_lea.vmem [#allocation9], %s1461
        // Predicated region
        $region49: #{tpu_custom_call.1} parent=31 // pred_check
          %p1463 = pneg %p138
        $region50: #{tpu_custom_call.1} parent=31 // pred_check_branch
          %1465 = sbr.rel (%p1463) target = $region52
        $region51: #{tpu_custom_call.1} parent=31 // pred_region
          %s1466 = smul.u32 16, %s32
          %s1468 = ssub.s32 2048, 2048
          %1469 = vsyncadd %s1454, %s1468
          %s1470 = smul.addr %s1466, 128
          %s1471 = scalar_lea.hbm %s3, %s1470
          %s1472 = sshll.u32 %s1457, 4
          %s1473 = int_to_ptr.vmem [resolvable:$true] %s1472
          %1478 = dma.vmem_to_hbm [thread:$0]  %s1473, 2048, %s1471, %s1454, 128, 128, 8
        $region52: #{tpu_custom_call.1} parent=31 // pred_fallthru
          _
        // Predicated region
        $region53: #{tpu_custom_call.1} parent=31 // pred_check
          %p1479 = pneg %p164
        $region54: #{tpu_custom_call.1} parent=31 // pred_check_branch
          %1481 = sbr.rel (%p1479) target = $region56
        $region55: #{tpu_custom_call.1} parent=31 // pred_region
          %s1482 = smul.u32 16, %s32
          %s1484 = ssub.s32 1024, 1024
          %1485 = vsyncadd %s1459, %s1484
          %s1486 = smul.addr %s1482, 64
          %s1487 = scalar_lea.hbm %s4, %s1486
          %s1488 = sshll.u32 %s1462, 4
          %s1489 = int_to_ptr.vmem [resolvable:$true] %s1488
          %1494 = dma.vmem_to_hbm [thread:$0]  %s1489, 1024, %s1487, %s1459, 64, 64, 4
        $region56: #{tpu_custom_call.1} parent=31 // pred_fallthru
          _
      $region32: #{tpu_custom_call.1} parent=5 // pred_fallthru
        _
      %p1495 = scmp.le.s32.totalorder 2, %s23
      // Predicated region
      $region57: #{tpu_custom_call.1} parent=5 // pred_check
        %p1496 = pneg %p1495
      $region58: #{tpu_custom_call.1} parent=5 // pred_check_branch
        %1498 = sbr.rel (%p1496) target = $region60
      $region59: #{tpu_custom_call.1} parent=5 // pred_region
        %s1499 = ssub.s32 %s23, 2
        // Predicated region
        $region61: #{tpu_custom_call.1} parent=59 // pred_check
          %p1500 = pneg %p144
        $region62: #{tpu_custom_call.1} parent=59 // pred_check_branch
          %1502 = sbr.rel (%p1500) target = $region64
        $region63: #{tpu_custom_call.1} parent=59 // pred_region
          %s1503 = sand.u32 %s129, 1
          %s1504 = scalar_lea.sflag [#allocation5], %s1503
          %s1505 = sand.u32 %s129, 1
          %s1506 = smul.addr %s1505, 128
          %s1507 = scalar_lea.vmem [#allocation8], %s1506
          %1508 = dma.done %s1504, 2048
        $region64: #{tpu_custom_call.1} parent=59 // pred_fallthru
          _
        // Predicated region
        $region65: #{tpu_custom_call.1} parent=59 // pred_check
          %p1509 = pneg %p170
        $region66: #{tpu_custom_call.1} parent=59 // pred_check_branch
          %1511 = sbr.rel (%p1509) target = $region68
        $region67: #{tpu_custom_call.1} parent=59 // pred_region
          %s1512 = sand.u32 %s155, 1
          %s1513 = scalar_lea.sflag [#allocation10], %s1512
          %s1514 = sand.u32 %s155, 1
          %s1515 = smul.addr %s1514, 64
          %s1516 = scalar_lea.vmem [#allocation9], %s1515
          %1517 = dma.done %s1513, 1024
        $region68: #{tpu_custom_call.1} parent=59 // pred_fallthru
          _
      $region60: #{tpu_custom_call.1} parent=5 // pred_fallthru
        _
    $region6: #{tpu_custom_call.1} parent=1 // loop_footer
      %s27 = sadd.s32 1, %s23
    $region7: #{tpu_custom_call.1} parent=1 // loop_footer_branch
      %22 = sbr.rel target = $region3
    $region8: #{tpu_custom_call.1} parent=1 // loop_exit
      _
    %1518 = vsyncpa [#allocation4], 1
    %s1519 = scalar_lea.sflag [#allocation4], 1
    %1520 = vsyncpa %s1519, 1
    %1521 = vsyncpa [#allocation7], 1
    %s1522 = scalar_lea.sflag [#allocation7], 1
    %1523 = vsyncpa %s1522, 1
    %1524 = vsyncpa [#allocation5], 1
    %s1525 = scalar_lea.sflag [#allocation5], 1
    %1526 = vsyncpa %s1525, 1
    %1527 = vsyncpa [#allocation10], 1
    %s1528 = scalar_lea.sflag [#allocation10], 1
    %1529 = vsyncpa %s1528, 1

</llo_original>
